<compile_context>
chip_gen: v7x
topology: tpu7x:2x2x1
jax: 0.10.0
libtpu: 0.0.40
codegen_flags: <defaults>
</compile_context>

<pallas_src>
import functools
import math

import jax
import jax.numpy as jnp
from jax.experimental import pallas as pl
from jax.experimental.pallas import tpu as pltpu

BN_EPSILON = 0.001
LANES = 128


def make_divisible(v, divisor=8, min_value=None):
    if min_value is None:
        min_value = divisor
    new_v = max(min_value, int(v + divisor / 2) // divisor * divisor)
    if new_v < 0.9 * v:
        new_v += divisor
    return new_v


def _ceil_to(c, m):
    return ((c + m - 1) // m) * m


# ----------------------------------------------------------------------------
# Fused ResNetBlock kernel: one grid step = one (batch, output row) pair.
# ----------------------------------------------------------------------------
def _resnet_row_kernel(*refs, stride, H, W, W_out, has_downsample, compute_dtype):
    if has_downsample:
        (r0, r1, r2, xd_ref,
         w1_ref, s1_ref, b1_ref,
         w2_ref, s2_ref, b2_ref,
         w3_ref, s3_ref, b3_ref,
         wd_ref, sd_ref, bd_ref,
         out_ref, h1_scr) = refs
    else:
        (r0, r1, r2,
         w1_ref, s1_ref, b1_ref,
         w2_ref, s2_ref, b2_ref,
         w3_ref, s3_ref, b3_ref,
         out_ref, h1_scr) = refs

    f32 = jnp.float32
    ho = pl.program_id(1)
    cp_mid = w1_ref.shape[1]
    h_out = (H - 1) // stride + 1

    # conv1 weights / folded BN stay resident in vregs across the 3 row taps.
    w1 = w1_ref[...]
    s1 = s1_ref[...]
    b1 = b1_ref[...]

    # Valid (non zero-padding) columns of a spatially padded row are 1..W.
    col = jax.lax.broadcasted_iota(jnp.int32, (W + 2, cp_mid), 0)
    col_ok = jnp.logical_and(col >= 1, col <= W)

    acc = jnp.zeros((W_out, cp_mid), f32)
    rows = (r0, r1, r2)
    for di in range(3):
        # conv1: 1x1 + BN + ReLU computed in-VMEM on the haloed row; h1 is
        # never written to HBM.
        xrow = rows[di][0, 0, :, :].astype(compute_dtype)          # (W+2, Cp_in)
        h1 = jnp.dot(xrow, w1, preferred_element_type=f32)
        h1 = jnp.maximum(h1 * s1 + b1, 0.0)                        # (W+2, Cp_mid)

        # conv2 zero-pads *after* conv1, so h1 must be zeroed at spatial
        # padding positions (conv1 of a zero pixel is relu(bias) != 0).
        mask = col_ok
        if di == 0:
            mask = jnp.logical_and(ho > 0, mask)                   # row stride*ho == 0
        elif stride * (h_out - 1) + di > H:
            mask = jnp.logical_and(stride * ho + di <= H, mask)    # bottom pad row
        h1 = jnp.where(mask, h1, 0.0)

        # conv2: accumulate the 3 column taps of this row tap on the MXU.
        h1_scr[...] = h1.astype(compute_dtype)
        for dj in range(3):
            if stride == 1:
                tap = h1_scr[pl.ds(dj, W_out), :]
            else:
                tap = h1_scr[pl.ds(dj, W_out, stride), :]          # strided column read
            acc = acc + jnp.dot(tap, w2_ref[di, dj, :, :],
                                preferred_element_type=f32)

    # conv2 BN + ReLU.
    h2 = jnp.maximum(acc * s2_ref[...] + b2_ref[...], 0.0)         # (W_out, Cp_mid)

    # conv3: 1x1 + BN, fused with the residual branch and the final ReLU.
    y = jnp.dot(h2.astype(compute_dtype), w3_ref[...], preferred_element_type=f32)
    y = y * s3_ref[...] + b3_ref[...]
    if has_downsample:
        res = jnp.dot(xd_ref[0, 0, :, :].astype(compute_dtype), wd_ref[...],
                      preferred_element_type=f32)
        res = res * sd_ref[...] + bd_ref[...]
    else:
        # Identity residual (stride == 1): the middle conv2 row tap is exactly
        # the un-padded input row, so reuse it instead of streaming x again.
        res = r1[0, 0, 1:W + 1, :].astype(f32)
    out_ref[0, 0, :, :] = jnp.maximum(y + res, 0.0).astype(out_ref.dtype)


# ----------------------------------------------------------------------------
# JAX glue: layout, channel padding, BN folding, avgpool, parameter init.
# ----------------------------------------------------------------------------
def _pad_channels(x, cp):
    c = x.shape[-1]
    if c == cp:
        return x
    return jnp.pad(x, [(0, 0)] * (x.ndim - 1) + [(0, cp - c)])


def _pad2d(w, rp, cp):
    r, c = w.shape
    return jnp.pad(w, ((0, rp - r), (0, cp - c)))


def _bn_fold_pad(bn, cp):
    gamma, beta, mean, var = bn
    scale = gamma / jnp.sqrt(var + BN_EPSILON)
    bias = beta - mean * scale
    c = scale.shape[0]
    scale = jnp.pad(scale, (0, cp - c)).reshape(1, cp).astype(jnp.float32)
    bias = jnp.pad(bias, (0, cp - c)).reshape(1, cp).astype(jnp.float32)
    return scale, bias


def _avgpool_ceil(x_nhwc, k):
    # AvgPool2d(kernel_size=k, stride=k, padding=0, ceil_mode=True).  Spatial
    # dims here are divisible by k, so ceil_mode never creates partial windows.
    # TODO(synk): handle ceil_mode partial windows for non-divisible sizes.
    N, H, W, C = x_nhwc.shape
    return x_nhwc.reshape(N, H // k, k, W // k, k, C).mean(axis=(2, 4))


def init_params(key, C_in, C_out, expansion_ratio=0.25):
    C_mid = make_divisible(round(C_out * expansion_ratio), 8)
    keys = jax.random.split(key, 8)

    def conv_w(k, shape):  # HWIO layout
        fan_in = shape[0] * shape[1] * shape[2]
        return jax.random.normal(k, shape, jnp.float32) / jnp.sqrt(float(fan_in))

    def bn_params(k, c):
        k1, k2, k3, k4 = jax.random.split(k, 4)
        gamma = 1.0 + 0.1 * jax.random.normal(k1, (c,), jnp.float32)
        beta = 0.1 * jax.random.normal(k2, (c,), jnp.float32)
        mean = 0.1 * jax.random.normal(k3, (c,), jnp.float32)
        var = jnp.abs(jax.random.normal(k4, (c,), jnp.float32)) + 0.5
        return gamma, beta, mean, var

    return {
        "C_mid": C_mid,
        "w1": conv_w(keys[0], (1, 1, C_in, C_mid)), "bn1": bn_params(keys[1], C_mid),
        "w2": conv_w(keys[2], (3, 3, C_mid, C_mid)), "bn2": bn_params(keys[3], C_mid),
        "w3": conv_w(keys[4], (1, 1, C_mid, C_out)), "bn3": bn_params(keys[5], C_out),
        "wd": conv_w(keys[6], (1, 1, C_in, C_out)), "bnd": bn_params(keys[7], C_out),
    }


# ----------------------------------------------------------------------------
# ResNetBlock forward (Pallas) and a pure-JAX reference.
# ----------------------------------------------------------------------------
def resnet_block_pallas(x_nchw, params, stride, C_out, compute_dtype=jnp.float32):
    cdt = compute_dtype
    x = jnp.transpose(x_nchw, (0, 2, 3, 1)).astype(jnp.float32)    # NCHW -> NHWC
    N, H, W, C_in = x.shape
    C_mid = params["C_mid"]
    assert H % stride == 0 and W % stride == 0  # see TODO in _avgpool_ceil
    H_out = (H - 1) // stride + 1
    W_out = (W - 1) // stride + 1
    Cp_in, Cp_mid, Cp_out = (_ceil_to(c, LANES) for c in (C_in, C_mid, C_out))
    identity = (stride == 1 and C_in == C_out)
    Wp2 = W + 2

    # Lane-dense layout: zero-pad channels to multiples of 128, then pad
    # spatially by 1 for the 3x3 conv halo.
    xc = _pad_channels(x, Cp_in)                                   # (N,H,W,Cp_in)
    x_pad = jnp.pad(xc, ((0, 0), (1, 1), (1, 1), (0, 0))).astype(cdt)

    w1 = _pad2d(params["w1"].reshape(C_in, C_mid), Cp_in, Cp_mid).astype(cdt)
    w2 = jnp.pad(params["w2"], ((0, 0), (0, 0),
                                (0, Cp_mid - C_mid), (0, Cp_mid - C_mid))).astype(cdt)
    w3 = _pad2d(params["w3"].reshape(C_mid, C_out), Cp_mid, Cp_out).astype(cdt)
    s1, b1 = _bn_fold_pad(params["bn1"], Cp_mid)
    s2, b2 = _bn_fold_pad(params["bn2"], Cp_mid)
    s3, b3 = _bn_fold_pad(params["bn3"], Cp_out)

    row_block = (1, 1, Wp2, Cp_in)

    def row_spec(k):
        return pl.BlockSpec(row_block, lambda n, h, k=k: (n, stride * h + k, 0, 0))

    def resident_spec(arr):  # whole array resident in VMEM (constant index_map)
        return pl.BlockSpec(arr.shape, lambda n, h, nd=arr.ndim: (0,) * nd)

    inputs = [x_pad, x_pad, x_pad]
    in_specs = [row_spec(0), row_spec(1), row_spec(2)]
    if not identity:
        # downsample branch: AvgPool(stride) as cheap JAX glue; its 1x1 conv +
        # BN + residual add are fused into the kernel epilogue.
        xd = _avgpool_ceil(xc, stride).astype(cdt)                 # (N,H_out,W_out,Cp_in)
        inputs.append(xd)
        in_specs.append(pl.BlockSpec((1, 1, W_out, Cp_in), lambda n, h: (n, h, 0, 0)))

    tail = [w1, s1, b1, w2, s2, b2, w3, s3, b3]
    if not identity:
        wd = _pad2d(params["wd"].reshape(C_in, C_out), Cp_in, Cp_out).astype(cdt)
        sd, bd = _bn_fold_pad(params["bnd"], Cp_out)
        tail += [wd, sd, bd]
    inputs += tail
    in_specs += [resident_spec(a) for a in tail]

    out_spec = pl.BlockSpec((1, 1, W_out, Cp_out), lambda n, h: (n, h, 0, 0))

    # Explicit VMEM budget: double-buffered streamed blocks + resident weights
    # + scratch, with margin, capped to fit v7x's 64 MiB physical VMEM.
    itemsize = jnp.dtype(cdt).itemsize
    stream_bytes = 3 * math.prod(row_block) * itemsize + W_out * Cp_out * 4
    if not identity:
        stream_bytes += W_out * Cp_in * itemsize
    resident_bytes = sum(int(a.size) * a.dtype.itemsize for a in tail)
    scratch_bytes = Wp2 * Cp_mid * itemsize
    est = 2 * (stream_bytes + resident_bytes) + scratch_bytes
    vmem_limit = int(min(60 * 2 ** 20, max(16 * 2 ** 20, 4 * est)))

    kernel = functools.partial(
        _resnet_row_kernel, stride=stride, H=H, W=W, W_out=W_out,
        has_downsample=not identity, compute_dtype=cdt)

    out = pl.pallas_call(
        kernel,
        out_shape=jax.ShapeDtypeStruct((N, H_out, W_out, Cp_out), jnp.float32),
        grid=(N, H_out),
        in_specs=in_specs,
        out_specs=out_spec,
        scratch_shapes=[pltpu.VMEM((Wp2, Cp_mid), cdt)],
        compiler_params=pltpu.CompilerParams(
            dimension_semantics=("parallel", "parallel"),
            vmem_limit_bytes=vmem_limit),
    )(*inputs)

    out = out[..., :C_out]                                         # drop channel padding
    return jnp.transpose(out, (0, 3, 1, 2))                        # NHWC -> NCHW


def resnet_block_ref(x_nchw, params, stride, C_out):
    x = jnp.transpose(x_nchw, (0, 2, 3, 1)).astype(jnp.float32)
    dn = ("NHWC", "HWIO", "NHWC")
    hi = jax.lax.Precision.HIGHEST

    def conv(x, w, s, p):
        return jax.lax.conv_general_dilated(x, w, (s, s), [(p, p), (p, p)],
                                            dimension_numbers=dn, precision=hi)

    def bn(x, prm):
        g, b, m, v = prm
        return (x - m) * (g / jnp.sqrt(v + BN_EPSILON)) + b

    C_in = x.shape[-1]
    if stride == 1 and C_in == C_out:
        res = x
    else:
        res = bn(conv(_avgpool_ceil(x, stride), params["wd"], 1, 0), params["bnd"])
    h = jnp.maximum(bn(conv(x, params["w1"], 1, 0), params["bn1"]), 0.0)
    h = jnp.maximum(bn(conv(h, params["w2"], stride, 1), params["bn2"]), 0.0)
    h = bn(conv(h, params["w3"], 1, 0), params["bn3"])
    out = jnp.maximum(h + res, 0.0)
    return jnp.transpose(out, (0, 3, 1, 2))


if __name__ == "__main__":
    key = jax.random.PRNGKey(0)
    k1, k2, k3, k4 = jax.random.split(key, 4)

    # Config 1: stride-2 bottleneck with the avgpool_conv downsample branch.
    N, C_in, H, W, C_out, stride = 2, 8, 16, 16, 16, 2
    x = jax.random.normal(k1, (N, C_in, H, W), jnp.float32)
    params = init_params(k2, C_in, C_out)
    out = jax.block_until_ready(resnet_block_pallas(x, params, stride, C_out))
    ref = jax.block_until_ready(resnet_block_ref(x, params, stride, C_out))
    assert out.shape == (N, C_out, H // stride, W // stride), out.shape
    err = float(jnp.max(jnp.abs(out - ref)))
    assert jnp.allclose(out, ref, atol=2e-2, rtol=2e-2), f"downsample max_err={err}"

    # Config 2: stride-1 identity-residual block.
    N2, C2, H2, W2 = 2, 16, 16, 16
    x2 = jax.random.normal(k3, (N2, C2, H2, W2), jnp.float32)
    params2 = init_params(k4, C2, C2)
    out2 = jax.block_until_ready(resnet_block_pallas(x2, params2, 1, C2))
    ref2 = jax.block_until_ready(resnet_block_ref(x2, params2, 1, C2))
    assert out2.shape == (N2, C2, H2, W2), out2.shape
    err2 = float(jnp.max(jnp.abs(out2 - ref2)))
    assert jnp.allclose(out2, ref2, atol=2e-2, rtol=2e-2), f"identity max_err={err2}"

    print("KERNEL_OK")
</pallas_src>

<mosaic_0001>
module attributes {stable_mosaic.version = 11 : i64} {
  func.func @_resnet_row_kernel(%arg0: i32, %arg1: i32, %arg2: memref<1x1x18x128xf32, #tpu.memory_space<vmem>>, %arg3: memref<1x1x18x128xf32, #tpu.memory_space<vmem>>, %arg4: memref<1x1x18x128xf32, #tpu.memory_space<vmem>>, %arg5: memref<1x1x8x128xf32, #tpu.memory_space<vmem>>, %arg6: memref<128x128xf32, #tpu.memory_space<vmem>>, %arg7: memref<1x128xf32, #tpu.memory_space<vmem>>, %arg8: memref<1x128xf32, #tpu.memory_space<vmem>>, %arg9: memref<3x3x128x128xf32, #tpu.memory_space<vmem>>, %arg10: memref<1x128xf32, #tpu.memory_space<vmem>>, %arg11: memref<1x128xf32, #tpu.memory_space<vmem>>, %arg12: memref<128x128xf32, #tpu.memory_space<vmem>>, %arg13: memref<1x128xf32, #tpu.memory_space<vmem>>, %arg14: memref<1x128xf32, #tpu.memory_space<vmem>>, %arg15: memref<128x128xf32, #tpu.memory_space<vmem>>, %arg16: memref<1x128xf32, #tpu.memory_space<vmem>>, %arg17: memref<1x128xf32, #tpu.memory_space<vmem>>, %arg18: memref<1x1x8x128xf32, #tpu.memory_space<vmem>>, %arg19: memref<18x128xf32, #tpu.memory_space<vmem>>) attributes {dimension_semantics = [#tpu.dimension_semantics<parallel>, #tpu.dimension_semantics<parallel>], iteration_bounds = array<i64: 2, 8>, scalar_prefetch = 0 : i64, scratch_operands = 1 : i64, tpu.core_type = #tpu.core_type<tc>, window_params = [{transform_indices = @transform_0, window_bounds = array<i64: 1, 1, 18, 128>}, {transform_indices = @transform_1, window_bounds = array<i64: 1, 1, 18, 128>}, {transform_indices = @transform_2, window_bounds = array<i64: 1, 1, 18, 128>}, {transform_indices = @transform_3, window_bounds = array<i64: 1, 1, 8, 128>}, {pipeline_mode = #tpu.pipeline_mode<synchronous>, transform_indices = @transform_4, window_bounds = array<i64: 128, 128>}, {pipeline_mode = #tpu.pipeline_mode<synchronous>, transform_indices = @transform_5, window_bounds = array<i64: 1, 128>}, {pipeline_mode = #tpu.pipeline_mode<synchronous>, transform_indices = @transform_6, window_bounds = array<i64: 1, 128>}, {pipeline_mode = #tpu.pipeline_mode<synchronous>, transform_indices = @transform_7, window_bounds = array<i64: 3, 3, 128, 128>}, {pipeline_mode = #tpu.pipeline_mode<synchronous>, transform_indices = @transform_8, window_bounds = array<i64: 1, 128>}, {pipeline_mode = #tpu.pipeline_mode<synchronous>, transform_indices = @transform_9, window_bounds = array<i64: 1, 128>}, {pipeline_mode = #tpu.pipeline_mode<synchronous>, transform_indices = @transform_10, window_bounds = array<i64: 128, 128>}, {pipeline_mode = #tpu.pipeline_mode<synchronous>, transform_indices = @transform_11, window_bounds = array<i64: 1, 128>}, {pipeline_mode = #tpu.pipeline_mode<synchronous>, transform_indices = @transform_12, window_bounds = array<i64: 1, 128>}, {pipeline_mode = #tpu.pipeline_mode<synchronous>, transform_indices = @transform_13, window_bounds = array<i64: 128, 128>}, {pipeline_mode = #tpu.pipeline_mode<synchronous>, transform_indices = @transform_14, window_bounds = array<i64: 1, 128>}, {pipeline_mode = #tpu.pipeline_mode<synchronous>, transform_indices = @transform_15, window_bounds = array<i64: 1, 128>}, {transform_indices = @transform_16, window_bounds = array<i64: 1, 1, 8, 128>}]} {
    %c0 = arith.constant 0 : index
    %c0_0 = arith.constant 0 : index
    %0 = vector.load %arg6[%c0, %c0_0] : memref<128x128xf32, #tpu.memory_space<vmem>>, vector<128x128xf32>
    %c0_1 = arith.constant 0 : index
    %c0_2 = arith.constant 0 : index
    %1 = vector.load %arg7[%c0_1, %c0_2] : memref<1x128xf32, #tpu.memory_space<vmem>>, vector<1x128xf32>
    %c0_3 = arith.constant 0 : index
    %c0_4 = arith.constant 0 : index
    %2 = vector.load %arg8[%c0_3, %c0_4] : memref<1x128xf32, #tpu.memory_space<vmem>>, vector<1x128xf32>
    %3 = tpu.iota {dimensions = array<i32: 0>} : vector<18x128xi32>
    %c1_i32 = arith.constant 1 : i32
    %4 = vector.broadcast %c1_i32 : i32 to vector<18x128xi32>
    %5 = arith.cmpi sge, %3, %4 : vector<18x128xi32>
    %c16_i32 = arith.constant 16 : i32
    %6 = vector.broadcast %c16_i32 : i32 to vector<18x128xi32>
    %7 = arith.cmpi sle, %3, %6 : vector<18x128xi32>
    %8 = arith.andi %5, %7 : vector<18x128xi1>
    %cst = arith.constant 0.000000e+00 : f32
    %9 = vector.broadcast %cst : f32 to vector<8x128xf32>
    %c0_5 = arith.constant 0 : index
    %c0_6 = arith.constant 0 : index
    %c0_7 = arith.constant 0 : index
    %c0_8 = arith.constant 0 : index
    %10 = vector.load %arg2[%c0_5, %c0_6, %c0_7, %c0_8] : memref<1x1x18x128xf32, #tpu.memory_space<vmem>>, vector<1x1x18x128xf32>
    %11 = vector.shape_cast %10 : vector<1x1x18x128xf32> to vector<18x128xf32>
    %cst_9 = arith.constant dense<0.000000e+00> : vector<18x128xf32>
    %12 = tpu.matmul %11, %0, %cst_9 {dimension_numbers = #tpu.dot_dimension_numbers<[1], [0], [0], [1], [0, 0, 1, 1], [], []>} : vector<18x128xf32>, vector<128x128xf32>, vector<18x128xf32> -> vector<18x128xf32>
    %13 = vector.broadcast %1 : vector<1x128xf32> to vector<18x128xf32>
    %14 = arith.mulf %12, %13 : vector<18x128xf32>
    %15 = vector.broadcast %2 : vector<1x128xf32> to vector<18x128xf32>
    %16 = arith.addf %14, %15 : vector<18x128xf32>
    %cst_10 = arith.constant 0.000000e+00 : f32
    %17 = vector.broadcast %cst_10 : f32 to vector<18x128xf32>
    %18 = arith.maximumf %16, %17 : vector<18x128xf32>
    %c0_i32 = arith.constant 0 : i32
    %19 = arith.cmpi sgt, %arg1, %c0_i32 : i32
    %20 = vector.broadcast %19 : i1 to vector<18x128xi1>
    %21 = arith.andi %20, %8 : vector<18x128xi1>
    %cst_11 = arith.constant 0.000000e+00 : f32
    %22 = vector.broadcast %cst_11 : f32 to vector<18x128xf32>
    %23 = arith.select %21, %18, %22 : vector<18x128xi1>, vector<18x128xf32>
    %c0_12 = arith.constant 0 : index
    %c0_13 = arith.constant 0 : index
    %24 = vector.load %arg19[%c0_12, %c0_13] : memref<18x128xf32, #tpu.memory_space<vmem>>, vector<18x128xf32>
    tpu.vector_store %arg19[%c0_12, %c0_13], %23 {strides = array<i32>} : memref<18x128xf32, #tpu.memory_space<vmem>>, vector<18x128xf32>,
    %c0_14 = arith.constant 0 : index
    %c0_15 = arith.constant 0 : index
    %25 = tpu.strided_load %arg19[%c0_14, %c0_15] {strides = array<i32: 2, 1>} : memref<18x128xf32, #tpu.memory_space<vmem>>, vector<8x128xf32>
    %c0_16 = arith.constant 0 : index
    %c0_17 = arith.constant 0 : index
    %c0_18 = arith.constant 0 : index
    %c0_19 = arith.constant 0 : index
    %26 = vector.load %arg9[%c0_16, %c0_17, %c0_18, %c0_19] : memref<3x3x128x128xf32, #tpu.memory_space<vmem>>, vector<1x1x128x128xf32>
    %27 = vector.shape_cast %26 : vector<1x1x128x128xf32> to vector<128x128xf32>
    %cst_20 = arith.constant dense<0.000000e+00> : vector<8x128xf32>
    %28 = tpu.matmul %25, %27, %cst_20 {dimension_numbers = #tpu.dot_dimension_numbers<[1], [0], [0], [1], [0, 0, 1, 1], [], []>} : vector<8x128xf32>, vector<128x128xf32>, vector<8x128xf32> -> vector<8x128xf32>
    %29 = arith.addf %9, %28 : vector<8x128xf32>
    %c1 = arith.constant 1 : index
    %c0_21 = arith.constant 0 : index
    %30 = tpu.strided_load %arg19[%c1, %c0_21] {strides = array<i32: 2, 1>} : memref<18x128xf32, #tpu.memory_space<vmem>>, vector<8x128xf32>
    %c0_22 = arith.constant 0 : index
    %c1_23 = arith.constant 1 : index
    %c0_24 = arith.constant 0 : index
    %c0_25 = arith.constant 0 : index
    %31 = vector.load %arg9[%c0_22, %c1_23, %c0_24, %c0_25] : memref<3x3x128x128xf32, #tpu.memory_space<vmem>>, vector<1x1x128x128xf32>
    %32 = vector.shape_cast %31 : vector<1x1x128x128xf32> to vector<128x128xf32>
    %cst_26 = arith.constant dense<0.000000e+00> : vector<8x128xf32>
    %33 = tpu.matmul %30, %32, %cst_26 {dimension_numbers = #tpu.dot_dimension_numbers<[1], [0], [0], [1], [0, 0, 1, 1], [], []>} : vector<8x128xf32>, vector<128x128xf32>, vector<8x128xf32> -> vector<8x128xf32>
    %34 = arith.addf %29, %33 : vector<8x128xf32>
    %c2 = arith.constant 2 : index
    %c0_27 = arith.constant 0 : index
    %35 = tpu.strided_load %arg19[%c2, %c0_27] {strides = array<i32: 2, 1>} : memref<18x128xf32, #tpu.memory_space<vmem>>, vector<8x128xf32>
    %c0_28 = arith.constant 0 : index
    %c2_29 = arith.constant 2 : index
    %c0_30 = arith.constant 0 : index
    %c0_31 = arith.constant 0 : index
    %36 = vector.load %arg9[%c0_28, %c2_29, %c0_30, %c0_31] : memref<3x3x128x128xf32, #tpu.memory_space<vmem>>, vector<1x1x128x128xf32>
    %37 = vector.shape_cast %36 : vector<1x1x128x128xf32> to vector<128x128xf32>
    %cst_32 = arith.constant dense<0.000000e+00> : vector<8x128xf32>
    %38 = tpu.matmul %35, %37, %cst_32 {dimension_numbers = #tpu.dot_dimension_numbers<[1], [0], [0], [1], [0, 0, 1, 1], [], []>} : vector<8x128xf32>, vector<128x128xf32>, vector<8x128xf32> -> vector<8x128xf32>
    %39 = arith.addf %34, %38 : vector<8x128xf32>
    %c0_33 = arith.constant 0 : index
    %c0_34 = arith.constant 0 : index
    %c0_35 = arith.constant 0 : index
    %c0_36 = arith.constant 0 : index
    %40 = vector.load %arg3[%c0_33, %c0_34, %c0_35, %c0_36] : memref<1x1x18x128xf32, #tpu.memory_space<vmem>>, vector<1x1x18x128xf32>
    %41 = vector.shape_cast %40 : vector<1x1x18x128xf32> to vector<18x128xf32>
    %cst_37 = arith.constant dense<0.000000e+00> : vector<18x128xf32>
    %42 = tpu.matmul %41, %0, %cst_37 {dimension_numbers = #tpu.dot_dimension_numbers<[1], [0], [0], [1], [0, 0, 1, 1], [], []>} : vector<18x128xf32>, vector<128x128xf32>, vector<18x128xf32> -> vector<18x128xf32>
    %43 = vector.broadcast %1 : vector<1x128xf32> to vector<18x128xf32>
    %44 = arith.mulf %42, %43 : vector<18x128xf32>
    %45 = vector.broadcast %2 : vector<1x128xf32> to vector<18x128xf32>
    %46 = arith.addf %44, %45 : vector<18x128xf32>
    %cst_38 = arith.constant 0.000000e+00 : f32
    %47 = vector.broadcast %cst_38 : f32 to vector<18x128xf32>
    %48 = arith.maximumf %46, %47 : vector<18x128xf32>
    %cst_39 = arith.constant 0.000000e+00 : f32
    %49 = vector.broadcast %cst_39 : f32 to vector<18x128xf32>
    %50 = arith.select %8, %48, %49 : vector<18x128xi1>, vector<18x128xf32>
    %c0_40 = arith.constant 0 : index
    %c0_41 = arith.constant 0 : index
    %51 = vector.load %arg19[%c0_40, %c0_41] : memref<18x128xf32, #tpu.memory_space<vmem>>, vector<18x128xf32>
    tpu.vector_store %arg19[%c0_40, %c0_41], %50 {strides = array<i32>} : memref<18x128xf32, #tpu.memory_space<vmem>>, vector<18x128xf32>,
    %c0_42 = arith.constant 0 : index
    %c0_43 = arith.constant 0 : index
    %52 = tpu.strided_load %arg19[%c0_42, %c0_43] {strides = array<i32: 2, 1>} : memref<18x128xf32, #tpu.memory_space<vmem>>, vector<8x128xf32>
    %c1_44 = arith.constant 1 : index
    %c0_45 = arith.constant 0 : index
    %c0_46 = arith.constant 0 : index
    %c0_47 = arith.constant 0 : index
    %53 = vector.load %arg9[%c1_44, %c0_45, %c0_46, %c0_47] : memref<3x3x128x128xf32, #tpu.memory_space<vmem>>, vector<1x1x128x128xf32>
    %54 = vector.shape_cast %53 : vector<1x1x128x128xf32> to vector<128x128xf32>
    %cst_48 = arith.constant dense<0.000000e+00> : vector<8x128xf32>
    %55 = tpu.matmul %52, %54, %cst_48 {dimension_numbers = #tpu.dot_dimension_numbers<[1], [0], [0], [1], [0, 0, 1, 1], [], []>} : vector<8x128xf32>, vector<128x128xf32>, vector<8x128xf32> -> vector<8x128xf32>
    %56 = arith.addf %39, %55 : vector<8x128xf32>
    %c1_49 = arith.constant 1 : index
    %c0_50 = arith.constant 0 : index
    %57 = tpu.strided_load %arg19[%c1_49, %c0_50] {strides = array<i32: 2, 1>} : memref<18x128xf32, #tpu.memory_space<vmem>>, vector<8x128xf32>
    %c1_51 = arith.constant 1 : index
    %c1_52 = arith.constant 1 : index
    %c0_53 = arith.constant 0 : index
    %c0_54 = arith.constant 0 : index
    %58 = vector.load %arg9[%c1_51, %c1_52, %c0_53, %c0_54] : memref<3x3x128x128xf32, #tpu.memory_space<vmem>>, vector<1x1x128x128xf32>
    %59 = vector.shape_cast %58 : vector<1x1x128x128xf32> to vector<128x128xf32>
    %cst_55 = arith.constant dense<0.000000e+00> : vector<8x128xf32>
    %60 = tpu.matmul %57, %59, %cst_55 {dimension_numbers = #tpu.dot_dimension_numbers<[1], [0], [0], [1], [0, 0, 1, 1], [], []>} : vector<8x128xf32>, vector<128x128xf32>, vector<8x128xf32> -> vector<8x128xf32>
    %61 = arith.addf %56, %60 : vector<8x128xf32>
    %c2_56 = arith.constant 2 : index
    %c0_57 = arith.constant 0 : index
    %62 = tpu.strided_load %arg19[%c2_56, %c0_57] {strides = array<i32: 2, 1>} : memref<18x128xf32, #tpu.memory_space<vmem>>, vector<8x128xf32>
    %c1_58 = arith.constant 1 : index
    %c2_59 = arith.constant 2 : index
    %c0_60 = arith.constant 0 : index
    %c0_61 = arith.constant 0 : index
    %63 = vector.load %arg9[%c1_58, %c2_59, %c0_60, %c0_61] : memref<3x3x128x128xf32, #tpu.memory_space<vmem>>, vector<1x1x128x128xf32>
    %64 = vector.shape_cast %63 : vector<1x1x128x128xf32> to vector<128x128xf32>
    %cst_62 = arith.constant dense<0.000000e+00> : vector<8x128xf32>
    %65 = tpu.matmul %62, %64, %cst_62 {dimension_numbers = #tpu.dot_dimension_numbers<[1], [0], [0], [1], [0, 0, 1, 1], [], []>} : vector<8x128xf32>, vector<128x128xf32>, vector<8x128xf32> -> vector<8x128xf32>
    %66 = arith.addf %61, %65 : vector<8x128xf32>
    %c0_63 = arith.constant 0 : index
    %c0_64 = arith.constant 0 : index
    %c0_65 = arith.constant 0 : index
    %c0_66 = arith.constant 0 : index
    %67 = vector.load %arg4[%c0_63, %c0_64, %c0_65, %c0_66] : memref<1x1x18x128xf32, #tpu.memory_space<vmem>>, vector<1x1x18x128xf32>
    %68 = vector.shape_cast %67 : vector<1x1x18x128xf32> to vector<18x128xf32>
    %cst_67 = arith.constant dense<0.000000e+00> : vector<18x128xf32>
    %69 = tpu.matmul %68, %0, %cst_67 {dimension_numbers = #tpu.dot_dimension_numbers<[1], [0], [0], [1], [0, 0, 1, 1], [], []>} : vector<18x128xf32>, vector<128x128xf32>, vector<18x128xf32> -> vector<18x128xf32>
    %70 = vector.broadcast %1 : vector<1x128xf32> to vector<18x128xf32>
    %71 = arith.mulf %69, %70 : vector<18x128xf32>
    %72 = vector.broadcast %2 : vector<1x128xf32> to vector<18x128xf32>
    %73 = arith.addf %71, %72 : vector<18x128xf32>
    %cst_68 = arith.constant 0.000000e+00 : f32
    %74 = vector.broadcast %cst_68 : f32 to vector<18x128xf32>
    %75 = arith.maximumf %73, %74 : vector<18x128xf32>
    %cst_69 = arith.constant 0.000000e+00 : f32
    %76 = vector.broadcast %cst_69 : f32 to vector<18x128xf32>
    %77 = arith.select %8, %75, %76 : vector<18x128xi1>, vector<18x128xf32>
    %c0_70 = arith.constant 0 : index
    %c0_71 = arith.constant 0 : index
    %78 = vector.load %arg19[%c0_70, %c0_71] : memref<18x128xf32, #tpu.memory_space<vmem>>, vector<18x128xf32>
    tpu.vector_store %arg19[%c0_70, %c0_71], %77 {strides = array<i32>} : memref<18x128xf32, #tpu.memory_space<vmem>>, vector<18x128xf32>,
    %c0_72 = arith.constant 0 : index
    %c0_73 = arith.constant 0 : index
    %79 = tpu.strided_load %arg19[%c0_72, %c0_73] {strides = array<i32: 2, 1>} : memref<18x128xf32, #tpu.memory_space<vmem>>, vector<8x128xf32>
    %c2_74 = arith.constant 2 : index
    %c0_75 = arith.constant 0 : index
    %c0_76 = arith.constant 0 : index
    %c0_77 = arith.constant 0 : index
    %80 = vector.load %arg9[%c2_74, %c0_75, %c0_76, %c0_77] : memref<3x3x128x128xf32, #tpu.memory_space<vmem>>, vector<1x1x128x128xf32>
    %81 = vector.shape_cast %80 : vector<1x1x128x128xf32> to vector<128x128xf32>
    %cst_78 = arith.constant dense<0.000000e+00> : vector<8x128xf32>
    %82 = tpu.matmul %79, %81, %cst_78 {dimension_numbers = #tpu.dot_dimension_numbers<[1], [0], [0], [1], [0, 0, 1, 1], [], []>} : vector<8x128xf32>, vector<128x128xf32>, vector<8x128xf32> -> vector<8x128xf32>
    %83 = arith.addf %66, %82 : vector<8x128xf32>
    %c1_79 = arith.constant 1 : index
    %c0_80 = arith.constant 0 : index
    %84 = tpu.strided_load %arg19[%c1_79, %c0_80] {strides = array<i32: 2, 1>} : memref<18x128xf32, #tpu.memory_space<vmem>>, vector<8x128xf32>
    %c2_81 = arith.constant 2 : index
    %c1_82 = arith.constant 1 : index
    %c0_83 = arith.constant 0 : index
    %c0_84 = arith.constant 0 : index
    %85 = vector.load %arg9[%c2_81, %c1_82, %c0_83, %c0_84] : memref<3x3x128x128xf32, #tpu.memory_space<vmem>>, vector<1x1x128x128xf32>
    %86 = vector.shape_cast %85 : vector<1x1x128x128xf32> to vector<128x128xf32>
    %cst_85 = arith.constant dense<0.000000e+00> : vector<8x128xf32>
    %87 = tpu.matmul %84, %86, %cst_85 {dimension_numbers = #tpu.dot_dimension_numbers<[1], [0], [0], [1], [0, 0, 1, 1], [], []>} : vector<8x128xf32>, vector<128x128xf32>, vector<8x128xf32> -> vector<8x128xf32>
    %88 = arith.addf %83, %87 : vector<8x128xf32>
    %c2_86 = arith.constant 2 : index
    %c0_87 = arith.constant 0 : index
    %89 = tpu.strided_load %arg19[%c2_86, %c0_87] {strides = array<i32: 2, 1>} : memref<18x128xf32, #tpu.memory_space<vmem>>, vector<8x128xf32>
    %c2_88 = arith.constant 2 : index
    %c2_89 = arith.constant 2 : index
    %c0_90 = arith.constant 0 : index
    %c0_91 = arith.constant 0 : index
    %90 = vector.load %arg9[%c2_88, %c2_89, %c0_90, %c0_91] : memref<3x3x128x128xf32, #tpu.memory_space<vmem>>, vector<1x1x128x128xf32>
    %91 = vector.shape_cast %90 : vector<1x1x128x128xf32> to vector<128x128xf32>
    %cst_92 = arith.constant dense<0.000000e+00> : vector<8x128xf32>
    %92 = tpu.matmul %89, %91, %cst_92 {dimension_numbers = #tpu.dot_dimension_numbers<[1], [0], [0], [1], [0, 0, 1, 1], [], []>} : vector<8x128xf32>, vector<128x128xf32>, vector<8x128xf32> -> vector<8x128xf32>
    %93 = arith.addf %88, %92 : vector<8x128xf32>
    %c0_93 = arith.constant 0 : index
    %c0_94 = arith.constant 0 : index
    %94 = vector.load %arg10[%c0_93, %c0_94] : memref<1x128xf32, #tpu.memory_space<vmem>>, vector<1x128xf32>
    %95 = vector.broadcast %94 : vector<1x128xf32> to vector<8x128xf32>
    %96 = arith.mulf %93, %95 : vector<8x128xf32>
    %c0_95 = arith.constant 0 : index
    %c0_96 = arith.constant 0 : index
    %97 = vector.load %arg11[%c0_95, %c0_96] : memref<1x128xf32, #tpu.memory_space<vmem>>, vector<1x128xf32>
    %98 = vector.broadcast %97 : vector<1x128xf32> to vector<8x128xf32>
    %99 = arith.addf %96, %98 : vector<8x128xf32>
    %cst_97 = arith.constant 0.000000e+00 : f32
    %100 = vector.broadcast %cst_97 : f32 to vector<8x128xf32>
    %101 = arith.maximumf %99, %100 : vector<8x128xf32>
    %c0_98 = arith.constant 0 : index
    %c0_99 = arith.constant 0 : index
    %102 = vector.load %arg12[%c0_98, %c0_99] : memref<128x128xf32, #tpu.memory_space<vmem>>, vector<128x128xf32>
    %cst_100 = arith.constant dense<0.000000e+00> : vector<8x128xf32>
    %103 = tpu.matmul %101, %102, %cst_100 {dimension_numbers = #tpu.dot_dimension_numbers<[1], [0], [0], [1], [0, 0, 1, 1], [], []>} : vector<8x128xf32>, vector<128x128xf32>, vector<8x128xf32> -> vector<8x128xf32>
    %c0_101 = arith.constant 0 : index
    %c0_102 = arith.constant 0 : index
    %104 = vector.load %arg13[%c0_101, %c0_102] : memref<1x128xf32, #tpu.memory_space<vmem>>, vector<1x128xf32>
    %105 = vector.broadcast %104 : vector<1x128xf32> to vector<8x128xf32>
    %106 = arith.mulf %103, %105 : vector<8x128xf32>
    %c0_103 = arith.constant 0 : index
    %c0_104 = arith.constant 0 : index
    %107 = vector.load %arg14[%c0_103, %c0_104] : memref<1x128xf32, #tpu.memory_space<vmem>>, vector<1x128xf32>
    %108 = vector.broadcast %107 : vector<1x128xf32> to vector<8x128xf32>
    %109 = arith.addf %106, %108 : vector<8x128xf32>
    %c0_105 = arith.constant 0 : index
    %c0_106 = arith.constant 0 : index
    %c0_107 = arith.constant 0 : index
    %c0_108 = arith.constant 0 : index
    %110 = vector.load %arg5[%c0_105, %c0_106, %c0_107, %c0_108] : memref<1x1x8x128xf32, #tpu.memory_space<vmem>>, vector<1x1x8x128xf32>
    %111 = vector.shape_cast %110 : vector<1x1x8x128xf32> to vector<8x128xf32>
    %c0_109 = arith.constant 0 : index
    %c0_110 = arith.constant 0 : index
    %112 = vector.load %arg15[%c0_109, %c0_110] : memref<128x128xf32, #tpu.memory_space<vmem>>, vector<128x128xf32>
    %cst_111 = arith.constant dense<0.000000e+00> : vector<8x128xf32>
    %113 = tpu.matmul %111, %112, %cst_111 {dimension_numbers = #tpu.dot_dimension_numbers<[1], [0], [0], [1], [0, 0, 1, 1], [], []>} : vector<8x128xf32>, vector<128x128xf32>, vector<8x128xf32> -> vector<8x128xf32>
    %c0_112 = arith.constant 0 : index
    %c0_113 = arith.constant 0 : index
    %114 = vector.load %arg16[%c0_112, %c0_113] : memref<1x128xf32, #tpu.memory_space<vmem>>, vector<1x128xf32>
    %115 = vector.broadcast %114 : vector<1x128xf32> to vector<8x128xf32>
    %116 = arith.mulf %113, %115 : vector<8x128xf32>
    %c0_114 = arith.constant 0 : index
    %c0_115 = arith.constant 0 : index
    %117 = vector.load %arg17[%c0_114, %c0_115] : memref<1x128xf32, #tpu.memory_space<vmem>>, vector<1x128xf32>
    %118 = vector.broadcast %117 : vector<1x128xf32> to vector<8x128xf32>
    %119 = arith.addf %116, %118 : vector<8x128xf32>
    %120 = arith.addf %109, %119 : vector<8x128xf32>
    %cst_116 = arith.constant 0.000000e+00 : f32
    %121 = vector.broadcast %cst_116 : f32 to vector<8x128xf32>
    %122 = arith.maximumf %120, %121 : vector<8x128xf32>
    %c0_117 = arith.constant 0 : index
    %c0_118 = arith.constant 0 : index
    %c0_119 = arith.constant 0 : index
    %c0_120 = arith.constant 0 : index
    %123 = vector.load %arg18[%c0_117, %c0_118, %c0_119, %c0_120] : memref<1x1x8x128xf32, #tpu.memory_space<vmem>>, vector<1x1x8x128xf32>
    %124 = vector.shape_cast %123 : vector<1x1x8x128xf32> to vector<8x128xf32>
    %125 = vector.shape_cast %122 : vector<8x128xf32> to vector<1x1x8x128xf32>
    tpu.vector_store %arg18[%c0_117, %c0_118, %c0_119, %c0_120], %125 {strides = array<i32>} : memref<1x1x8x128xf32, #tpu.memory_space<vmem>>, vector<1x1x8x128xf32>,
    return
  }
  func.func @transform_0(%arg0: i32, %arg1: i32) -> (i32, i32, i32, i32) {
    %c2_i32 = arith.constant 2 : i32
    %0 = arith.muli %c2_i32, %arg1 : i32
    %c0_i32 = arith.constant 0 : i32
    %1 = arith.addi %0, %c0_i32 : i32
    %c0_i32_0 = arith.constant 0 : i32
    %c0_i32_1 = arith.constant 0 : i32
    %c0_i32_2 = arith.constant 0 : i32
    return %arg0, %1, %c0_i32_0, %c0_i32_1 : i32, i32, i32, i32
  }
  func.func @transform_1(%arg0: i32, %arg1: i32) -> (i32, i32, i32, i32) {
    %c2_i32 = arith.constant 2 : i32
    %0 = arith.muli %c2_i32, %arg1 : i32
    %c1_i32 = arith.constant 1 : i32
    %1 = arith.addi %0, %c1_i32 : i32
    %c0_i32 = arith.constant 0 : i32
    %c0_i32_0 = arith.constant 0 : i32
    %c0_i32_1 = arith.constant 0 : i32
    return %arg0, %1, %c0_i32, %c0_i32_0 : i32, i32, i32, i32
  }
  func.func @transform_2(%arg0: i32, %arg1: i32) -> (i32, i32, i32, i32) {
    %c2_i32 = arith.constant 2 : i32
    %0 = arith.muli %c2_i32, %arg1 : i32
    %c2_i32_0 = arith.constant 2 : i32
    %1 = arith.addi %0, %c2_i32_0 : i32
    %c0_i32 = arith.constant 0 : i32
    %c0_i32_1 = arith.constant 0 : i32
    %c0_i32_2 = arith.constant 0 : i32
    return %arg0, %1, %c0_i32, %c0_i32_1 : i32, i32, i32, i32
  }
  func.func @transform_3(%arg0: i32, %arg1: i32) -> (i32, i32, i32, i32) {
    %c0_i32 = arith.constant 0 : i32
    %c0_i32_0 = arith.constant 0 : i32
    %c0_i32_1 = arith.constant 0 : i32
    return %arg0, %arg1, %c0_i32, %c0_i32_0 : i32, i32, i32, i32
  }
  func.func @transform_4(%arg0: i32, %arg1: i32) -> (i32, i32) {
    %c0_i32 = arith.constant 0 : i32
    %c0_i32_0 = arith.constant 0 : i32
    %c0_i32_1 = arith.constant 0 : i32
    return %c0_i32, %c0_i32_0 : i32, i32
  }
  func.func @transform_5(%arg0: i32, %arg1: i32) -> (i32, i32) {
    %c0_i32 = arith.constant 0 : i32
    %c0_i32_0 = arith.constant 0 : i32
    %c0_i32_1 = arith.constant 0 : i32
    return %c0_i32, %c0_i32_0 : i32, i32
  }
  func.func @transform_6(%arg0: i32, %arg1: i32) -> (i32, i32) {
    %c0_i32 = arith.constant 0 : i32
    %c0_i32_0 = arith.constant 0 : i32
    %c0_i32_1 = arith.constant 0 : i32
    return %c0_i32, %c0_i32_0 : i32, i32
  }
  func.func @transform_7(%arg0: i32, %arg1: i32) -> (i32, i32, i32, i32) {
    %c0_i32 = arith.constant 0 : i32
    %c0_i32_0 = arith.constant 0 : i32
    %c0_i32_1 = arith.constant 0 : i32
    %c0_i32_2 = arith.constant 0 : i32
    %c0_i32_3 = arith.constant 0 : i32
    return %c0_i32, %c0_i32_0, %c0_i32_1, %c0_i32_2 : i32, i32, i32, i32
  }
  func.func @transform_8(%arg0: i32, %arg1: i32) -> (i32, i32) {
    %c0_i32 = arith.constant 0 : i32
    %c0_i32_0 = arith.constant 0 : i32
    %c0_i32_1 = arith.constant 0 : i32
    return %c0_i32, %c0_i32_0 : i32, i32
  }
  func.func @transform_9(%arg0: i32, %arg1: i32) -> (i32, i32) {
    %c0_i32 = arith.constant 0 : i32
    %c0_i32_0 = arith.constant 0 : i32
    %c0_i32_1 = arith.constant 0 : i32
    return %c0_i32, %c0_i32_0 : i32, i32
  }
  func.func @transform_10(%arg0: i32, %arg1: i32) -> (i32, i32) {
    %c0_i32 = arith.constant 0 : i32
    %c0_i32_0 = arith.constant 0 : i32
    %c0_i32_1 = arith.constant 0 : i32
    return %c0_i32, %c0_i32_0 : i32, i32
  }
  func.func @transform_11(%arg0: i32, %arg1: i32) -> (i32, i32) {
    %c0_i32 = arith.constant 0 : i32
    %c0_i32_0 = arith.constant 0 : i32
    %c0_i32_1 = arith.constant 0 : i32
    return %c0_i32, %c0_i32_0 : i32, i32
  }
  func.func @transform_12(%arg0: i32, %arg1: i32) -> (i32, i32) {
    %c0_i32 = arith.constant 0 : i32
    %c0_i32_0 = arith.constant 0 : i32
    %c0_i32_1 = arith.constant 0 : i32
    return %c0_i32, %c0_i32_0 : i32, i32
  }
  func.func @transform_13(%arg0: i32, %arg1: i32) -> (i32, i32) {
    %c0_i32 = arith.constant 0 : i32
    %c0_i32_0 = arith.constant 0 : i32
    %c0_i32_1 = arith.constant 0 : i32
    return %c0_i32, %c0_i32_0 : i32, i32
  }
  func.func @transform_14(%arg0: i32, %arg1: i32) -> (i32, i32) {
    %c0_i32 = arith.constant 0 : i32
    %c0_i32_0 = arith.constant 0 : i32
    %c0_i32_1 = arith.constant 0 : i32
    return %c0_i32, %c0_i32_0 : i32, i32
  }
  func.func @transform_15(%arg0: i32, %arg1: i32) -> (i32, i32) {
    %c0_i32 = arith.constant 0 : i32
    %c0_i32_0 = arith.constant 0 : i32
    %c0_i32_1 = arith.constant 0 : i32
    return %c0_i32, %c0_i32_0 : i32, i32
  }
  func.func @transform_16(%arg0: i32, %arg1: i32) -> (i32, i32, i32, i32) {
    %c0_i32 = arith.constant 0 : i32
    %c0_i32_0 = arith.constant 0 : i32
    %c0_i32_1 = arith.constant 0 : i32
    return %arg0, %arg1, %c0_i32, %c0_i32_0 : i32, i32, i32, i32
  }
}

</mosaic_0001>

<llo_original>
// kernel: tpu_custom_call.1
$region0: #{tpu_custom_call.1}
  #allocation0 [shape = 'u32[]', space=smem, size = 0x4, offset = 0x4, fixed_abs, tag = 'smem constant byte address 0x4 - core index']
  #allocation1 [shape = 'u32[144,128]{1,0:T(1,128)}', space=vmem, size = 0x12000, scoped, tag = 'internal scratch']
  #allocation2 [shape = 'f32[18,128]{1,0:T(8,128)}', space=vmem, size = 0x3000, scoped, tag = 'scratch operand']
  %s0 = inlined_call_operand.vmem [shape: f32[2,18,18,128], index: 0, kind: input, shape index: {}]
  %s1 = inlined_call_operand.vmem [shape: f32[2,18,18,128], index: 1, kind: input, shape index: {}]
  %s2 = inlined_call_operand.vmem [shape: f32[2,18,18,128], index: 2, kind: input, shape index: {}]
  %s3 = inlined_call_operand.vmem [shape: f32[2,8,8,128], index: 3, kind: input, shape index: {}]
  %s4 = inlined_call_operand.vmem [shape: f32[128,128], index: 4, kind: input, shape index: {}]
  %s5 = inlined_call_operand.vmem [shape: f32[1,128], index: 5, kind: input, shape index: {}]
  %s6 = inlined_call_operand.vmem [shape: f32[1,128], index: 6, kind: input, shape index: {}]
  %s7 = inlined_call_operand.vmem [shape: f32[3,3,128,128], index: 7, kind: input, shape index: {}]
  %s8 = inlined_call_operand.vmem [shape: f32[1,128], index: 8, kind: input, shape index: {}]
  %s9 = inlined_call_operand.vmem [shape: f32[1,128], index: 9, kind: input, shape index: {}]
  %s10 = inlined_call_operand.vmem [shape: f32[128,128], index: 10, kind: input, shape index: {}]
  %s11 = inlined_call_operand.vmem [shape: f32[1,128], index: 11, kind: input, shape index: {}]
  %s12 = inlined_call_operand.vmem [shape: f32[1,128], index: 12, kind: input, shape index: {}]
  %s13 = inlined_call_operand.vmem [shape: f32[128,128], index: 13, kind: input, shape index: {}]
  %s14 = inlined_call_operand.vmem [shape: f32[1,128], index: 14, kind: input, shape index: {}]
  %s15 = inlined_call_operand.vmem [shape: f32[1,128], index: 15, kind: input, shape index: {}]
  %s16 = inlined_call_operand.hbm [shape: f32[2,8,8,128], index: 16, kind: output, shape index: {}]
  %s17 = sld [smem:[#allocation0]]
  $region97: #{tpu_custom_call.1} parent=0
    _
  %s19 = ssub.s32 1, %s17
  %s20 = scalar_select 0, %s19, %s17
  $region1: #{tpu_custom_call.1} parent=0
    #allocation3 [shape = 'u8[8192]{0}', space=vmem, size = 0x2000, scoped, tag = 'output window, operand 0']
    #allocation4 [shape = 's32[2]{0}', space=sflag, size = 0x8, scoped, tag = 'scoped memory for tpu_custom_call.1']
    %21 = vsyncpa [#allocation4], 0
    %s22 = scalar_lea.sflag [#allocation4], 1
    %23 = vsyncpa %s22, 0
    loop: start=0, step=1, limit=18
    $region2: #{tpu_custom_call.1} parent=1 // loop_pre_header
      _
    $region3: #{tpu_custom_call.1} parent=1 // loop_header
      %s25 = sphi 0, %s29
      %p26 = scmp.ge.s32.totalorder %s25, 18
      %s32 = sphi 0, %s44
      %s33 = sphi 0, %s40
      %s34 = sphi 0, %s32
      %s35 = sphi 0, %s33
      %s36 = sphi 0, %s34
      %s37 = sphi 0, %s35
      %s51 = sphi 0, %s53
      %s54 = sphi 0, %s51
      %s55 = sphi 0, %s54
      %s71 = sphi 0, %s55
      %s83 = sphi 0, %s85
      %s86 = sphi 0, %s83
      %s87 = sphi 0, %s86
      %s103 = sphi 0, %s87
      %s115 = sphi 0, %s117
      %s118 = sphi 0, %s115
      %s119 = sphi 0, %s118
      %s135 = sphi 0, %s119
      %s143 = sphi 0, %s145
      %s146 = sphi 0, %s143
      %s147 = sphi 0, %s146
      %s163 = sphi 0, %s147
      %s167 = sphi 0, %s167
      %s169 = sphi 0, %s167
      %s170 = sphi 0, %s169
      %s184 = sphi 0, %s170
      %s188 = sphi 0, %s188
      %s190 = sphi 0, %s188
      %s191 = sphi 0, %s190
      %s205 = sphi 0, %s191
      %s209 = sphi 0, %s209
      %s211 = sphi 0, %s209
      %s212 = sphi 0, %s211
      %s226 = sphi 0, %s212
      %s230 = sphi 0, %s230
      %s232 = sphi 0, %s230
      %s233 = sphi 0, %s232
      %s247 = sphi 0, %s233
      %s251 = sphi 0, %s251
      %s253 = sphi 0, %s251
      %s254 = sphi 0, %s253
      %s268 = sphi 0, %s254
      %s272 = sphi 0, %s272
      %s274 = sphi 0, %s272
      %s275 = sphi 0, %s274
      %s289 = sphi 0, %s275
      %s293 = sphi 0, %s293
      %s295 = sphi 0, %s293
      %s296 = sphi 0, %s295
      %s310 = sphi 0, %s296
      %s314 = sphi 0, %s314
      %s316 = sphi 0, %s314
      %s317 = sphi 0, %s316
      %s331 = sphi 0, %s317
      %s335 = sphi 0, %s335
      %s337 = sphi 0, %s335
      %s338 = sphi 0, %s337
      %s352 = sphi 0, %s338
      %s356 = sphi 0, %s356
      %s358 = sphi 0, %s356
      %s359 = sphi 0, %s358
      %s373 = sphi 0, %s359
      %s377 = sphi 0, %s377
      %s379 = sphi 0, %s377
      %s380 = sphi 0, %s379
      %s394 = sphi 0, %s380
      %s398 = sphi 0, %s398
      %s400 = sphi 0, %s398
      %s401 = sphi 0, %s400
      %s415 = sphi 0, %s401
      %s423 = sphi 0, %s425
      %s426 = sphi 0, %s423
      %s427 = sphi 0, %s426
      %s443 = sphi 0, %s427
    $region4: #{tpu_custom_call.1} parent=1 // loop_header_branch
      %28 = sbr.rel (%p26) target = $region8
    $region5: #{tpu_custom_call.1} parent=1 // loop_body
      %s30 = ssub.s32 %s25, 1
      %s31 = ssub.s32 %s25, 2
      %s38 = sadd.s32 1, %s33
      %p39 = scmp.ge.s32.totalorder %s38, 8
      %s40 = scalar_select %p39, 0, %s38
      %s41 = sadd.s32 1, %s32
      %s42 = scalar_select %p39, %s41, %s32
      %p43 = scmp.ge.s32.totalorder %s42, 2
      %s44 = scalar_select %p43, 0, %s42
      %s45 = smul.u32 %s33, 2
      %s46 = smul.u32 %s40, 2
      %s47 = ssub.s32 %s32, %s44
      %s48 = ssub.s32 %s45, %s46
      %s49 = sor.u32 %s47, %s48
      %p50 = scmp.eq.s32.totalorder %s49, 0
      %s52 = sadd.s32 %s51, 1
      %s53 = scalar_select %p50, %s51, %s52
      %p56 = pneg %p50
      %p57 = scmp.eq.s32.totalorder %s25, 15
      %p58 = por %p56, %p57
      %p59 = scmp.ne.s32.totalorder %s51, %s54
      %p60 = scmp.eq.s32.totalorder %s25, 0
      %p61 = por %p59, %p60
      %p62 = scmp.ne.s32.totalorder %s51, %s54
      %p63 = scmp.eq.s32.totalorder %s30, 15
      %p64 = por %p62, %p63
      %p65 = scmp.ne.s32.totalorder %s54, %s55
      %p66 = scmp.eq.s32.totalorder %s30, 0
      %p67 = por %p65, %p66
      %p68 = scmp.ne.s32.totalorder %s54, %s55
      %p69 = scmp.eq.s32.totalorder %s31, 15
      %p70 = por %p68, %p69
      %p72 = scmp.ne.s32.totalorder %s55, %s71
      %p73 = scmp.eq.s32.totalorder %s31, 0
      %p74 = por %p72, %p73
      %s75 = smul.u32 %s33, 2
      %s76 = sadd.s32 %s75, 1
      %s77 = smul.u32 %s40, 2
      %s78 = sadd.s32 %s77, 1
      %s79 = ssub.s32 %s32, %s44
      %s80 = ssub.s32 %s76, %s78
      %s81 = sor.u32 %s79, %s80
      %p82 = scmp.eq.s32.totalorder %s81, 0
      %s84 = sadd.s32 %s83, 1
      %s85 = scalar_select %p82, %s83, %s84
      %p88 = pneg %p82
      %p89 = scmp.eq.s32.totalorder %s25, 15
      %p90 = por %p88, %p89
      %p91 = scmp.ne.s32.totalorder %s83, %s86
      %p92 = scmp.eq.s32.totalorder %s25, 0
      %p93 = por %p91, %p92
      %p94 = scmp.ne.s32.totalorder %s83, %s86
      %p95 = scmp.eq.s32.totalorder %s30, 15
      %p96 = por %p94, %p95
      %p97 = scmp.ne.s32.totalorder %s86, %s87
      %p98 = scmp.eq.s32.totalorder %s30, 0
      %p99 = por %p97, %p98
      %p100 = scmp.ne.s32.totalorder %s86, %s87
      %p101 = scmp.eq.s32.totalorder %s31, 15
      %p102 = por %p100, %p101
      %p104 = scmp.ne.s32.totalorder %s87, %s103
      %p105 = scmp.eq.s32.totalorder %s31, 0
      %p106 = por %p104, %p105
      %s107 = smul.u32 %s33, 2
      %s108 = sadd.s32 %s107, 2
      %s109 = smul.u32 %s40, 2
      %s110 = sadd.s32 %s109, 2
      %s111 = ssub.s32 %s32, %s44
      %s112 = ssub.s32 %s108, %s110
      %s113 = sor.u32 %s111, %s112
      %p114 = scmp.eq.s32.totalorder %s113, 0
      %s116 = sadd.s32 %s115, 1
      %s117 = scalar_select %p114, %s115, %s116
      %p120 = pneg %p114
      %p121 = scmp.eq.s32.totalorder %s25, 15
      %p122 = por %p120, %p121
      %p123 = scmp.ne.s32.totalorder %s115, %s118
      %p124 = scmp.eq.s32.totalorder %s25, 0
      %p125 = por %p123, %p124
      %p126 = scmp.ne.s32.totalorder %s115, %s118
      %p127 = scmp.eq.s32.totalorder %s30, 15
      %p128 = por %p126, %p127
      %p129 = scmp.ne.s32.totalorder %s118, %s119
      %p130 = scmp.eq.s32.totalorder %s30, 0
      %p131 = por %p129, %p130
      %p132 = scmp.ne.s32.totalorder %s118, %s119
      %p133 = scmp.eq.s32.totalorder %s31, 15
      %p134 = por %p132, %p133
      %p136 = scmp.ne.s32.totalorder %s119, %s135
      %p137 = scmp.eq.s32.totalorder %s31, 0
      %p138 = por %p136, %p137
      %s139 = ssub.s32 %s32, %s44
      %s140 = ssub.s32 %s33, %s40
      %s141 = sor.u32 %s139, %s140
      %p142 = scmp.eq.s32.totalorder %s141, 0
      %s144 = sadd.s32 %s143, 1
      %s145 = scalar_select %p142, %s143, %s144
      %p148 = pneg %p142
      %p149 = scmp.eq.s32.totalorder %s25, 15
      %p150 = por %p148, %p149
      %p151 = scmp.ne.s32.totalorder %s143, %s146
      %p152 = scmp.eq.s32.totalorder %s25, 0
      %p153 = por %p151, %p152
      %p154 = scmp.ne.s32.totalorder %s143, %s146
      %p155 = scmp.eq.s32.totalorder %s30, 15
      %p156 = por %p154, %p155
      %p157 = scmp.ne.s32.totalorder %s146, %s147
      %p158 = scmp.eq.s32.totalorder %s30, 0
      %p159 = por %p157, %p158
      %p160 = scmp.ne.s32.totalorder %s146, %s147
      %p161 = scmp.eq.s32.totalorder %s31, 15
      %p162 = por %p160, %p161
      %p164 = scmp.ne.s32.totalorder %s147, %s163
      %p165 = scmp.eq.s32.totalorder %s31, 0
      %p166 = por %p164, %p165
      %s168 = sadd.s32 %s167, 1
      %p171 = scmp.eq.s32.totalorder %s25, 15
      %p172 = scmp.ne.s32.totalorder %s167, %s169
      %p173 = scmp.eq.s32.totalorder %s25, 0
      %p174 = por %p172, %p173
      %p175 = scmp.ne.s32.totalorder %s167, %s169
      %p176 = scmp.eq.s32.totalorder %s30, 15
      %p177 = por %p175, %p176
      %p178 = scmp.ne.s32.totalorder %s169, %s170
      %p179 = scmp.eq.s32.totalorder %s30, 0
      %p180 = por %p178, %p179
      %p181 = scmp.ne.s32.totalorder %s169, %s170
      %p182 = scmp.eq.s32.totalorder %s31, 15
      %p183 = por %p181, %p182
      %p185 = scmp.ne.s32.totalorder %s170, %s184
      %p186 = scmp.eq.s32.totalorder %s31, 0
      %p187 = por %p185, %p186
      %s189 = sadd.s32 %s188, 1
      %p192 = scmp.eq.s32.totalorder %s25, 15
      %p193 = scmp.ne.s32.totalorder %s188, %s190
      %p194 = scmp.eq.s32.totalorder %s25, 0
      %p195 = por %p193, %p194
      %p196 = scmp.ne.s32.totalorder %s188, %s190
      %p197 = scmp.eq.s32.totalorder %s30, 15
      %p198 = por %p196, %p197
      %p199 = scmp.ne.s32.totalorder %s190, %s191
      %p200 = scmp.eq.s32.totalorder %s30, 0
      %p201 = por %p199, %p200
      %p202 = scmp.ne.s32.totalorder %s190, %s191
      %p203 = scmp.eq.s32.totalorder %s31, 15
      %p204 = por %p202, %p203
      %p206 = scmp.ne.s32.totalorder %s191, %s205
      %p207 = scmp.eq.s32.totalorder %s31, 0
      %p208 = por %p206, %p207
      %s210 = sadd.s32 %s209, 1
      %p213 = scmp.eq.s32.totalorder %s25, 15
      %p214 = scmp.ne.s32.totalorder %s209, %s211
      %p215 = scmp.eq.s32.totalorder %s25, 0
      %p216 = por %p214, %p215
      %p217 = scmp.ne.s32.totalorder %s209, %s211
      %p218 = scmp.eq.s32.totalorder %s30, 15
      %p219 = por %p217, %p218
      %p220 = scmp.ne.s32.totalorder %s211, %s212
      %p221 = scmp.eq.s32.totalorder %s30, 0
      %p222 = por %p220, %p221
      %p223 = scmp.ne.s32.totalorder %s211, %s212
      %p224 = scmp.eq.s32.totalorder %s31, 15
      %p225 = por %p223, %p224
      %p227 = scmp.ne.s32.totalorder %s212, %s226
      %p228 = scmp.eq.s32.totalorder %s31, 0
      %p229 = por %p227, %p228
      %s231 = sadd.s32 %s230, 1
      %p234 = scmp.eq.s32.totalorder %s25, 15
      %p235 = scmp.ne.s32.totalorder %s230, %s232
      %p236 = scmp.eq.s32.totalorder %s25, 0
      %p237 = por %p235, %p236
      %p238 = scmp.ne.s32.totalorder %s230, %s232
      %p239 = scmp.eq.s32.totalorder %s30, 15
      %p240 = por %p238, %p239
      %p241 = scmp.ne.s32.totalorder %s232, %s233
      %p242 = scmp.eq.s32.totalorder %s30, 0
      %p243 = por %p241, %p242
      %p244 = scmp.ne.s32.totalorder %s232, %s233
      %p245 = scmp.eq.s32.totalorder %s31, 15
      %p246 = por %p244, %p245
      %p248 = scmp.ne.s32.totalorder %s233, %s247
      %p249 = scmp.eq.s32.totalorder %s31, 0
      %p250 = por %p248, %p249
      %s252 = sadd.s32 %s251, 1
      %p255 = scmp.eq.s32.totalorder %s25, 15
      %p256 = scmp.ne.s32.totalorder %s251, %s253
      %p257 = scmp.eq.s32.totalorder %s25, 0
      %p258 = por %p256, %p257
      %p259 = scmp.ne.s32.totalorder %s251, %s253
      %p260 = scmp.eq.s32.totalorder %s30, 15
      %p261 = por %p259, %p260
      %p262 = scmp.ne.s32.totalorder %s253, %s254
      %p263 = scmp.eq.s32.totalorder %s30, 0
      %p264 = por %p262, %p263
      %p265 = scmp.ne.s32.totalorder %s253, %s254
      %p266 = scmp.eq.s32.totalorder %s31, 15
      %p267 = por %p265, %p266
      %p269 = scmp.ne.s32.totalorder %s254, %s268
      %p270 = scmp.eq.s32.totalorder %s31, 0
      %p271 = por %p269, %p270
      %s273 = sadd.s32 %s272, 1
      %p276 = scmp.eq.s32.totalorder %s25, 15
      %p277 = scmp.ne.s32.totalorder %s272, %s274
      %p278 = scmp.eq.s32.totalorder %s25, 0
      %p279 = por %p277, %p278
      %p280 = scmp.ne.s32.totalorder %s272, %s274
      %p281 = scmp.eq.s32.totalorder %s30, 15
      %p282 = por %p280, %p281
      %p283 = scmp.ne.s32.totalorder %s274, %s275
      %p284 = scmp.eq.s32.totalorder %s30, 0
      %p285 = por %p283, %p284
      %p286 = scmp.ne.s32.totalorder %s274, %s275
      %p287 = scmp.eq.s32.totalorder %s31, 15
      %p288 = por %p286, %p287
      %p290 = scmp.ne.s32.totalorder %s275, %s289
      %p291 = scmp.eq.s32.totalorder %s31, 0
      %p292 = por %p290, %p291
      %s294 = sadd.s32 %s293, 1
      %p297 = scmp.eq.s32.totalorder %s25, 15
      %p298 = scmp.ne.s32.totalorder %s293, %s295
      %p299 = scmp.eq.s32.totalorder %s25, 0
      %p300 = por %p298, %p299
      %p301 = scmp.ne.s32.totalorder %s293, %s295
      %p302 = scmp.eq.s32.totalorder %s30, 15
      %p303 = por %p301, %p302
      %p304 = scmp.ne.s32.totalorder %s295, %s296
      %p305 = scmp.eq.s32.totalorder %s30, 0
      %p306 = por %p304, %p305
      %p307 = scmp.ne.s32.totalorder %s295, %s296
      %p308 = scmp.eq.s32.totalorder %s31, 15
      %p309 = por %p307, %p308
      %p311 = scmp.ne.s32.totalorder %s296, %s310
      %p312 = scmp.eq.s32.totalorder %s31, 0
      %p313 = por %p311, %p312
      %s315 = sadd.s32 %s314, 1
      %p318 = scmp.eq.s32.totalorder %s25, 15
      %p319 = scmp.ne.s32.totalorder %s314, %s316
      %p320 = scmp.eq.s32.totalorder %s25, 0
      %p321 = por %p319, %p320
      %p322 = scmp.ne.s32.totalorder %s314, %s316
      %p323 = scmp.eq.s32.totalorder %s30, 15
      %p324 = por %p322, %p323
      %p325 = scmp.ne.s32.totalorder %s316, %s317
      %p326 = scmp.eq.s32.totalorder %s30, 0
      %p327 = por %p325, %p326
      %p328 = scmp.ne.s32.totalorder %s316, %s317
      %p329 = scmp.eq.s32.totalorder %s31, 15
      %p330 = por %p328, %p329
      %p332 = scmp.ne.s32.totalorder %s317, %s331
      %p333 = scmp.eq.s32.totalorder %s31, 0
      %p334 = por %p332, %p333
      %s336 = sadd.s32 %s335, 1
      %p339 = scmp.eq.s32.totalorder %s25, 15
      %p340 = scmp.ne.s32.totalorder %s335, %s337
      %p341 = scmp.eq.s32.totalorder %s25, 0
      %p342 = por %p340, %p341
      %p343 = scmp.ne.s32.totalorder %s335, %s337
      %p344 = scmp.eq.s32.totalorder %s30, 15
      %p345 = por %p343, %p344
      %p346 = scmp.ne.s32.totalorder %s337, %s338
      %p347 = scmp.eq.s32.totalorder %s30, 0
      %p348 = por %p346, %p347
      %p349 = scmp.ne.s32.totalorder %s337, %s338
      %p350 = scmp.eq.s32.totalorder %s31, 15
      %p351 = por %p349, %p350
      %p353 = scmp.ne.s32.totalorder %s338, %s352
      %p354 = scmp.eq.s32.totalorder %s31, 0
      %p355 = por %p353, %p354
      %s357 = sadd.s32 %s356, 1
      %p360 = scmp.eq.s32.totalorder %s25, 15
      %p361 = scmp.ne.s32.totalorder %s356, %s358
      %p362 = scmp.eq.s32.totalorder %s25, 0
      %p363 = por %p361, %p362
      %p364 = scmp.ne.s32.totalorder %s356, %s358
      %p365 = scmp.eq.s32.totalorder %s30, 15
      %p366 = por %p364, %p365
      %p367 = scmp.ne.s32.totalorder %s358, %s359
      %p368 = scmp.eq.s32.totalorder %s30, 0
      %p369 = por %p367, %p368
      %p370 = scmp.ne.s32.totalorder %s358, %s359
      %p371 = scmp.eq.s32.totalorder %s31, 15
      %p372 = por %p370, %p371
      %p374 = scmp.ne.s32.totalorder %s359, %s373
      %p375 = scmp.eq.s32.totalorder %s31, 0
      %p376 = por %p374, %p375
      %s378 = sadd.s32 %s377, 1
      %p381 = scmp.eq.s32.totalorder %s25, 15
      %p382 = scmp.ne.s32.totalorder %s377, %s379
      %p383 = scmp.eq.s32.totalorder %s25, 0
      %p384 = por %p382, %p383
      %p385 = scmp.ne.s32.totalorder %s377, %s379
      %p386 = scmp.eq.s32.totalorder %s30, 15
      %p387 = por %p385, %p386
      %p388 = scmp.ne.s32.totalorder %s379, %s380
      %p389 = scmp.eq.s32.totalorder %s30, 0
      %p390 = por %p388, %p389
      %p391 = scmp.ne.s32.totalorder %s379, %s380
      %p392 = scmp.eq.s32.totalorder %s31, 15
      %p393 = por %p391, %p392
      %p395 = scmp.ne.s32.totalorder %s380, %s394
      %p396 = scmp.eq.s32.totalorder %s31, 0
      %p397 = por %p395, %p396
      %s399 = sadd.s32 %s398, 1
      %p402 = scmp.eq.s32.totalorder %s25, 15
      %p403 = scmp.ne.s32.totalorder %s398, %s400
      %p404 = scmp.eq.s32.totalorder %s25, 0
      %p405 = por %p403, %p404
      %p406 = scmp.ne.s32.totalorder %s398, %s400
      %p407 = scmp.eq.s32.totalorder %s30, 15
      %p408 = por %p406, %p407
      %p409 = scmp.ne.s32.totalorder %s400, %s401
      %p410 = scmp.eq.s32.totalorder %s30, 0
      %p411 = por %p409, %p410
      %p412 = scmp.ne.s32.totalorder %s400, %s401
      %p413 = scmp.eq.s32.totalorder %s31, 15
      %p414 = por %p412, %p413
      %p416 = scmp.ne.s32.totalorder %s401, %s415
      %p417 = scmp.eq.s32.totalorder %s31, 0
      %p418 = por %p416, %p417
      %s419 = ssub.s32 %s32, %s44
      %s420 = ssub.s32 %s33, %s40
      %s421 = sor.u32 %s419, %s420
      %p422 = scmp.eq.s32.totalorder %s421, 0
      %s424 = sadd.s32 %s423, 1
      %s425 = scalar_select %p422, %s423, %s424
      %p428 = pneg %p422
      %p429 = scmp.eq.s32.totalorder %s25, 15
      %p430 = por %p428, %p429
      %p431 = scmp.ne.s32.totalorder %s423, %s426
      %p432 = scmp.eq.s32.totalorder %s25, 0
      %p433 = por %p431, %p432
      %p434 = scmp.ne.s32.totalorder %s423, %s426
      %p435 = scmp.eq.s32.totalorder %s30, 15
      %p436 = por %p434, %p435
      %p437 = scmp.ne.s32.totalorder %s426, %s427
      %p438 = scmp.eq.s32.totalorder %s30, 0
      %p439 = por %p437, %p438
      %p440 = scmp.ne.s32.totalorder %s426, %s427
      %p441 = scmp.eq.s32.totalorder %s31, 15
      %p442 = por %p440, %p441
      %p444 = scmp.ne.s32.totalorder %s427, %s443
      %p445 = scmp.eq.s32.totalorder %s31, 0
      %p446 = por %p444, %p445
      %p447 = scmp.le.s32.totalorder 1, %s25
      %p448 = scmp.lt.s32.totalorder %s25, 17
      %p449 = pnand %p447, %p448
      %p450 = pneg %p449
      // Predicated region
      $region9: #{tpu_custom_call.1} parent=5 // pred_check
        _
      $region10: #{tpu_custom_call.1} parent=5 // pred_check_branch
        %452 = sbr.rel (%p449) target = $region12
      $region11: #{tpu_custom_call.1} parent=5 // pred_region
        %s453 = ssub.s32 %s25, 1
        // Predicated region
        $region13: #{tpu_custom_call.1} parent=11 // pred_check
          %p454 = pneg %p180
        $region14: #{tpu_custom_call.1} parent=11 // pred_check_branch
          %456 = sbr.rel (%p454) target = $region16
        $region15: #{tpu_custom_call.1} parent=11 // pred_region
          _
        $region16: #{tpu_custom_call.1} parent=11 // pred_fallthru
          _
        // Predicated region
        $region17: #{tpu_custom_call.1} parent=11 // pred_check
          %p457 = pneg %p201
        $region18: #{tpu_custom_call.1} parent=11 // pred_check_branch
          %459 = sbr.rel (%p457) target = $region20
        $region19: #{tpu_custom_call.1} parent=11 // pred_region
          _
        $region20: #{tpu_custom_call.1} parent=11 // pred_fallthru
          _
        // Predicated region
        $region21: #{tpu_custom_call.1} parent=11 // pred_check
          %p460 = pneg %p222
        $region22: #{tpu_custom_call.1} parent=11 // pred_check_branch
          %462 = sbr.rel (%p460) target = $region24
        $region23: #{tpu_custom_call.1} parent=11 // pred_region
          _
        $region24: #{tpu_custom_call.1} parent=11 // pred_fallthru
          _
        // Predicated region
        $region25: #{tpu_custom_call.1} parent=11 // pred_check
          %p463 = pneg %p243
        $region26: #{tpu_custom_call.1} parent=11 // pred_check_branch
          %465 = sbr.rel (%p463) target = $region28
        $region27: #{tpu_custom_call.1} parent=11 // pred_region
          _
        $region28: #{tpu_custom_call.1} parent=11 // pred_fallthru
          _
        // Predicated region
        $region29: #{tpu_custom_call.1} parent=11 // pred_check
          %p466 = pneg %p264
        $region30: #{tpu_custom_call.1} parent=11 // pred_check_branch
          %468 = sbr.rel (%p466) target = $region32
        $region31: #{tpu_custom_call.1} parent=11 // pred_region
          _
        $region32: #{tpu_custom_call.1} parent=11 // pred_fallthru
          _
        // Predicated region
        $region33: #{tpu_custom_call.1} parent=11 // pred_check
          %p469 = pneg %p285
        $region34: #{tpu_custom_call.1} parent=11 // pred_check_branch
          %471 = sbr.rel (%p469) target = $region36
        $region35: #{tpu_custom_call.1} parent=11 // pred_region
          _
        $region36: #{tpu_custom_call.1} parent=11 // pred_fallthru
          _
        // Predicated region
        $region37: #{tpu_custom_call.1} parent=11 // pred_check
          %p472 = pneg %p306
        $region38: #{tpu_custom_call.1} parent=11 // pred_check_branch
          %474 = sbr.rel (%p472) target = $region40
        $region39: #{tpu_custom_call.1} parent=11 // pred_region
          _
        $region40: #{tpu_custom_call.1} parent=11 // pred_fallthru
          _
        // Predicated region
        $region41: #{tpu_custom_call.1} parent=11 // pred_check
          %p475 = pneg %p327
        $region42: #{tpu_custom_call.1} parent=11 // pred_check_branch
          %477 = sbr.rel (%p475) target = $region44
        $region43: #{tpu_custom_call.1} parent=11 // pred_region
          _
        $region44: #{tpu_custom_call.1} parent=11 // pred_fallthru
          _
        // Predicated region
        $region45: #{tpu_custom_call.1} parent=11 // pred_check
          %p478 = pneg %p348
        $region46: #{tpu_custom_call.1} parent=11 // pred_check_branch
          %480 = sbr.rel (%p478) target = $region48
        $region47: #{tpu_custom_call.1} parent=11 // pred_region
          _
        $region48: #{tpu_custom_call.1} parent=11 // pred_fallthru
          _
        // Predicated region
        $region49: #{tpu_custom_call.1} parent=11 // pred_check
          %p481 = pneg %p369
        $region50: #{tpu_custom_call.1} parent=11 // pred_check_branch
          %483 = sbr.rel (%p481) target = $region52
        $region51: #{tpu_custom_call.1} parent=11 // pred_region
          _
        $region52: #{tpu_custom_call.1} parent=11 // pred_fallthru
          _
        // Predicated region
        $region53: #{tpu_custom_call.1} parent=11 // pred_check
          %p484 = pneg %p390
        $region54: #{tpu_custom_call.1} parent=11 // pred_check_branch
          %486 = sbr.rel (%p484) target = $region56
        $region55: #{tpu_custom_call.1} parent=11 // pred_region
          _
        $region56: #{tpu_custom_call.1} parent=11 // pred_fallthru
          _
        // Predicated region
        $region57: #{tpu_custom_call.1} parent=11 // pred_check
          %p487 = pneg %p411
        $region58: #{tpu_custom_call.1} parent=11 // pred_check_branch
          %489 = sbr.rel (%p487) target = $region60
        $region59: #{tpu_custom_call.1} parent=11 // pred_region
          _
        $region60: #{tpu_custom_call.1} parent=11 // pred_fallthru
          _
      $region12: #{tpu_custom_call.1} parent=5 // pred_fallthru
        _
      %p490 = scmp.lt.s32.totalorder %s25, 16
      // Predicated region
      $region61: #{tpu_custom_call.1} parent=5 // pred_check
        %p491 = pneg %p490
      $region62: #{tpu_custom_call.1} parent=5 // pred_check_branch
        %493 = sbr.rel (%p491) target = $region64
      $region63: #{tpu_custom_call.1} parent=5 // pred_region
        // Predicated region
        $region65: #{tpu_custom_call.1} parent=63 // pred_check
          %p494 = pneg %p61
        $region66: #{tpu_custom_call.1} parent=63 // pred_check_branch
          %496 = sbr.rel (%p494) target = $region68
        $region67: #{tpu_custom_call.1} parent=63 // pred_region
          %s497 = smul.u32 %s33, 2
          %p498 = scmp.lt.s32.totalorder %s32, 1
          %s499 = scalar_select %p498, %s32, 1
          %p500 = scmp.lt.s32.totalorder %s497, 17
          %s501 = scalar_select %p500, %s497, 17
          %s502 = smul.addr %s501, 3
          %s503 = smul.addr %s499, 54
          %s504 = sadd.s32 %s502, %s503
          %s505 = smul.addr %s504, 8
          %s506 = scalar_lea.vmem %s0, %s505
          %s507 = smul.u32 %s33, 2
        $region68: #{tpu_custom_call.1} parent=63 // pred_fallthru
          _
        // Predicated region
        $region69: #{tpu_custom_call.1} parent=63 // pred_check
          %p508 = pneg %p93
        $region70: #{tpu_custom_call.1} parent=63 // pred_check_branch
          %510 = sbr.rel (%p508) target = $region72
        $region71: #{tpu_custom_call.1} parent=63 // pred_region
          %s511 = smul.u32 %s33, 2
          %s512 = sadd.s32 %s511, 1
          %p513 = scmp.lt.s32.totalorder %s32, 1
          %s514 = scalar_select %p513, %s32, 1
          %p515 = scmp.lt.s32.totalorder %s512, 17
          %s516 = scalar_select %p515, %s512, 17
          %s517 = smul.addr %s516, 3
          %s518 = smul.addr %s514, 54
          %s519 = sadd.s32 %s517, %s518
          %s520 = smul.addr %s519, 8
          %s521 = scalar_lea.vmem %s1, %s520
          %s522 = smul.u32 %s33, 2
          %s523 = sadd.s32 %s522, 1
        $region72: #{tpu_custom_call.1} parent=63 // pred_fallthru
          _
        // Predicated region
        $region73: #{tpu_custom_call.1} parent=63 // pred_check
          %p524 = pneg %p125
        $region74: #{tpu_custom_call.1} parent=63 // pred_check_branch
          %526 = sbr.rel (%p524) target = $region76
        $region75: #{tpu_custom_call.1} parent=63 // pred_region
          %s527 = smul.u32 %s33, 2
          %s528 = sadd.s32 %s527, 2
          %p529 = scmp.lt.s32.totalorder %s32, 1
          %s530 = scalar_select %p529, %s32, 1
          %p531 = scmp.lt.s32.totalorder %s528, 17
          %s532 = scalar_select %p531, %s528, 17
          %s533 = smul.addr %s532, 3
          %s534 = smul.addr %s530, 54
          %s535 = sadd.s32 %s533, %s534
          %s536 = smul.addr %s535, 8
          %s537 = scalar_lea.vmem %s2, %s536
          %s538 = smul.u32 %s33, 2
          %s539 = sadd.s32 %s538, 2
        $region76: #{tpu_custom_call.1} parent=63 // pred_fallthru
          _
        // Predicated region
        $region77: #{tpu_custom_call.1} parent=63 // pred_check
          %p540 = pneg %p153
        $region78: #{tpu_custom_call.1} parent=63 // pred_check_branch
          %542 = sbr.rel (%p540) target = $region80
        $region79: #{tpu_custom_call.1} parent=63 // pred_region
          %p543 = scmp.lt.s32.totalorder %s32, 1
          %s544 = scalar_select %p543, %s32, 1
          %p545 = scmp.lt.s32.totalorder %s33, 7
          %s546 = scalar_select %p545, %s33, 7
          %s547 = smul.addr %s544, 8
          %s548 = sadd.s32 %s546, %s547
          %s549 = smul.addr %s548, 8
          %s550 = scalar_lea.vmem %s3, %s549
        $region80: #{tpu_custom_call.1} parent=63 // pred_fallthru
          _
      $region64: #{tpu_custom_call.1} parent=5 // pred_fallthru
        _
      %p551 = scmp.le.s32.totalorder 1, %s25
      %p552 = scmp.lt.s32.totalorder %s25, 17
      %p553 = pnand %p551, %p552
      %p554 = pneg %p553
      // Predicated region
      $region81: #{tpu_custom_call.1} parent=5 // pred_check
        _
      $region82: #{tpu_custom_call.1} parent=5 // pred_check_branch
        %556 = sbr.rel (%p553) target = $region84
      $region83: #{tpu_custom_call.1} parent=5 // pred_region
        %s557 = ssub.s32 %s25, 1
        %s558 = smul.u32 %s35, 2
        %p559 = scmp.lt.s32.totalorder %s34, 1
        %s560 = scalar_select %p559, %s34, 1
        %p561 = scmp.lt.s32.totalorder %s558, 17
        %s562 = scalar_select %p561, %s558, 17
        %s563 = smul.addr %s562, 3
        %s564 = smul.addr %s560, 54
        %s565 = sadd.s32 %s563, %s564
        %s566 = smul.addr %s565, 8
        %s567 = scalar_lea.vmem %s0, %s566
        %p568 = pneg %p67
        %p569 = pneg %p64
        %s570 = smul.u32 %s35, 2
        %s571 = sadd.s32 %s570, 1
        %p572 = scmp.lt.s32.totalorder %s34, 1
        %s573 = scalar_select %p572, %s34, 1
        %p574 = scmp.lt.s32.totalorder %s571, 17
        %s575 = scalar_select %p574, %s571, 17
        %s576 = smul.addr %s575, 3
        %s577 = smul.addr %s573, 54
        %s578 = sadd.s32 %s576, %s577
        %s579 = smul.addr %s578, 8
        %s580 = scalar_lea.vmem %s1, %s579
        %p581 = pneg %p99
        %p582 = pneg %p96
        %s583 = smul.u32 %s35, 2
        %s584 = sadd.s32 %s583, 2
        %p585 = scmp.lt.s32.totalorder %s34, 1
        %s586 = scalar_select %p585, %s34, 1
        %p587 = scmp.lt.s32.totalorder %s584, 17
        %s588 = scalar_select %p587, %s584, 17
        %s589 = smul.addr %s588, 3
        %s590 = smul.addr %s586, 54
        %s591 = sadd.s32 %s589, %s590
        %s592 = smul.addr %s591, 8
        %s593 = scalar_lea.vmem %s2, %s592
        %p594 = pneg %p131
        %p595 = pneg %p128
        %p596 = scmp.lt.s32.totalorder %s34, 1
        %s597 = scalar_select %p596, %s34, 1
        %p598 = scmp.lt.s32.totalorder %s35, 7
        %s599 = scalar_select %p598, %s35, 7
        %s600 = smul.addr %s597, 8
        %s601 = sadd.s32 %s599, %s600
        %s602 = smul.addr %s601, 8
        %s603 = scalar_lea.vmem %s3, %s602
        %p604 = pneg %p159
        %p605 = pneg %p156
        %p606 = pneg %p180
        %p607 = pneg %p177
        %p608 = pneg %p201
        %p609 = pneg %p198
        %p610 = pneg %p222
        %p611 = pneg %p219
        %p612 = pneg %p243
        %p613 = pneg %p240
        %p614 = pneg %p264
        %p615 = pneg %p261
        %p616 = pneg %p285
        %p617 = pneg %p282
        %p618 = pneg %p306
        %p619 = pneg %p303
        %p620 = pneg %p327
        %p621 = pneg %p324
        %p622 = pneg %p348
        %p623 = pneg %p345
        %p624 = pneg %p369
        %p625 = pneg %p366
        %p626 = pneg %p390
        %p627 = pneg %p387
        %p628 = pneg %p411
        %p629 = pneg %p408
        %p630 = pneg %p439
        %p631 = pneg %p436
        %s632 = sand.u32 %s426, 1
        %s633 = scalar_lea.sflag [#allocation4], %s632
        %s634 = sand.u32 %s426, 1
        %s635 = smul.addr %s634, 8
        %s636 = scalar_lea.vmem [#allocation3], %s635
        %s637 = smul.u32 %s35, 2
        %p638 = scmp.lt.s32.totalorder %s34, 1
        %s639 = scalar_select %p638, %s34, 1
        %p640 = scmp.lt.s32.totalorder %s637, 17
        %s641 = scalar_select %p640, %s637, 17
        %s642 = smul.addr %s641, 3
        %s643 = smul.addr %s639, 54
        %s644 = sadd.s32 %s642, %s643
        %s645 = smul.addr %s644, 8
        %s646 = scalar_lea.vmem %s0, %s645
        %s647 = smul.u32 %s35, 2
        %s648 = smul.u32 %s35, 2
        %s649 = sadd.s32 %s648, 1
        %p650 = scmp.lt.s32.totalorder %s34, 1
        %s651 = scalar_select %p650, %s34, 1
        %p652 = scmp.lt.s32.totalorder %s649, 17
        %s653 = scalar_select %p652, %s649, 17
        %s654 = smul.addr %s653, 3
        %s655 = smul.addr %s651, 54
        %s656 = sadd.s32 %s654, %s655
        %s657 = smul.addr %s656, 8
        %s658 = scalar_lea.vmem %s1, %s657
        %s659 = smul.u32 %s35, 2
        %s660 = sadd.s32 %s659, 1
        %s661 = smul.u32 %s35, 2
        %s662 = sadd.s32 %s661, 2
        %p663 = scmp.lt.s32.totalorder %s34, 1
        %s664 = scalar_select %p663, %s34, 1
        %p665 = scmp.lt.s32.totalorder %s662, 17
        %s666 = scalar_select %p665, %s662, 17
        %s667 = smul.addr %s666, 3
        %s668 = smul.addr %s664, 54
        %s669 = sadd.s32 %s667, %s668
        %s670 = smul.addr %s669, 8
        %s671 = scalar_lea.vmem %s2, %s670
        %s672 = smul.u32 %s35, 2
        %s673 = sadd.s32 %s672, 2
        %p674 = scmp.lt.s32.totalorder %s34, 1
        %s675 = scalar_select %p674, %s34, 1
        %p676 = scmp.lt.s32.totalorder %s35, 7
        %s677 = scalar_select %p676, %s35, 7
        %s678 = smul.addr %s675, 8
        %s679 = sadd.s32 %s677, %s678
        %s680 = smul.addr %s679, 8
        %s681 = scalar_lea.vmem %s3, %s680
        %v682 = vld [vmem:[%s4] sm:$0xff]
        %v683 = vld [vmem:[%s4 + $0x8] sm:$0xff]
        %v684 = vld [vmem:[%s4 + $0x10] sm:$0xff]
        %v685 = vld [vmem:[%s4 + $0x18] sm:$0xff]
        %v686 = vld [vmem:[%s4 + $0x20] sm:$0xff]
        %v687 = vld [vmem:[%s4 + $0x28] sm:$0xff]
        %v688 = vld [vmem:[%s4 + $0x30] sm:$0xff]
        %v689 = vld [vmem:[%s4 + $0x38] sm:$0xff]
        %v690 = vld [vmem:[%s4 + $0x40] sm:$0xff]
        %v691 = vld [vmem:[%s4 + $0x48] sm:$0xff]
        %v692 = vld [vmem:[%s4 + $0x50] sm:$0xff]
        %v693 = vld [vmem:[%s4 + $0x58] sm:$0xff]
        %v694 = vld [vmem:[%s4 + $0x60] sm:$0xff]
        %v695 = vld [vmem:[%s4 + $0x68] sm:$0xff]
        %v696 = vld [vmem:[%s4 + $0x70] sm:$0xff]
        %v697 = vld [vmem:[%s4 + $0x78] sm:$0xff]
        %v698 = vld [vmem:[%s5] sm:$0x1]
        %v699 = vld [vmem:[%s6] sm:$0x1]
        %v700 = vlaneseq
        %v701 = vshrl.u32 %v700, 7
        %v702 = vadd.s32 %v701, 8
        %v703 = vadd.s32 %v701, 16
        %vm704 = vcmp.ge.s32.totalorder %v701, 1
        %vm705 = vcmp.ge.s32.totalorder %v702, 1
        %vm706 = vcmp.ge.s32.totalorder %v703, 1
        %vm707 = vcmp.le.s32.totalorder %v701, 16
        %vm708 = vcmp.le.s32.totalorder %v702, 16
        %vm709 = vcmp.le.s32.totalorder %v703, 16
        %vm710 = vmand %vm704, %vm707
        %vm711 = vmand %vm705, %vm708
        %vm712 = vmand %vm706, %vm709
        %v713 = vld [vmem:[%s646] sm:$0xff]
        %v714 = vld [vmem:[%s646 + $0x8] sm:$0xff]
        %v715 = vld [vmem:[%s646 + $0x10] sm:$0x3]
        %716 = vmatprep.subr.mxu0 0.0
        %717 = vmatpush1.msra.mxu0 %v682
        %718 = vmatprep.subr.mxu0 0.0
        %719 = vmatpush1.msra.mxu0 %v683
        %720 = vmatprep.subr.mxu0 0.0
        %721 = vmatpush1.msra.mxu0 %v684
        %722 = vmatprep.subr.mxu0 0.0
        %723 = vmatpush1.msra.mxu0 %v685
        %724 = vmatprep.subr.mxu0 0.0
        %725 = vmatpush1.msra.mxu0 %v686
        %726 = vmatprep.subr.mxu0 0.0
        %727 = vmatpush1.msra.mxu0 %v687
        %728 = vmatprep.subr.mxu0 0.0
        %729 = vmatpush1.msra.mxu0 %v688
        %730 = vmatprep.subr.mxu0 0.0
        %731 = vmatpush1.msra.mxu0 %v689
        %732 = vmatprep.subr.mxu0 0.0
        %733 = vmatpush1.msra.mxu0 %v690
        %734 = vmatprep.subr.mxu0 0.0
        %735 = vmatpush1.msra.mxu0 %v691
        %736 = vmatprep.subr.mxu0 0.0
        %737 = vmatpush1.msra.mxu0 %v692
        %738 = vmatprep.subr.mxu0 0.0
        %739 = vmatpush1.msra.mxu0 %v693
        %740 = vmatprep.subr.mxu0 0.0
        %741 = vmatpush1.msra.mxu0 %v694
        %742 = vmatprep.subr.mxu0 0.0
        %743 = vmatpush1.msra.mxu0 %v695
        %744 = vmatprep.subr.mxu0 0.0
        %745 = vmatpush1.msra.mxu0 %v696
        %746 = vmatprep.subr.mxu0 0.0
        %747 = vmatpush1.msra.mxu0 %v697
        %748 = vmatprep.subr.mxu0 0.0
        %749 = vmatpush1.msra.mxu0 0.0
        %750 = vmatprep.subr.mxu0 0.0
        %751 = vmatpush1.msra.mxu0 0.0
        %752 = vmatprep.subr.mxu0 0.0
        %753 = vmatpush1.msra.mxu0 0.0
        %754 = vmatprep.subr.mxu0 0.0
        %755 = vmatpush1.msra.mxu0 0.0
        %756 = vmatprep.subr.mxu0 0.0
        %757 = vmatpush1.msra.mxu0 0.0
        %758 = vmatprep.subr.mxu0 0.0
        %759 = vmatpush1.msra.mxu0 0.0
        %760 = vmatprep.subr.mxu0 0.0
        %761 = vmatpush1.msra.mxu0 0.0
        %762 = vmatprep.subr.mxu0 0.0
        %763 = vmatpush1.msra.mxu0 0.0
        %764 = vmatprep.subr.mxu0 0.0
        %765 = vmatpush1.msra.mxu0 0.0
        %766 = vmatprep.subr.mxu0 0.0
        %767 = vmatpush1.msra.mxu0 0.0
        %768 = vmatprep.subr.mxu0 0.0
        %769 = vmatpush1.msra.mxu0 0.0
        %770 = vmatprep.subr.mxu0 0.0
        %771 = vmatpush1.msra.mxu0 0.0
        %772 = vmatprep.subr.mxu0 0.0
        %773 = vmatpush1.msra.mxu0 0.0
        %774 = vmatprep.subr.mxu0 0.0
        %775 = vmatpush1.msra.mxu0 0.0
        %776 = vmatprep.subr.mxu0 0.0
        %777 = vmatpush1.msra.mxu0 0.0
        %778 = vmatprep.subr.mxu0 0.0
        %779 = vmatpush1.msra.mxu0 0.0
        %780 = vmatprep.mubr.f32.mxu0 0.0
        %781 = vmatmul.mubr.f32.gmra.mrb[0].mxu0 %v713
        %v782 = vpop.f32.mrb[0].mxu0
        %v783 = vadd.f32 0.0, %v782
        %v784 = vpop.f32.mrb[0].mxu0
        %785 = vmatprep.mubr.f32.mxu0 0.0
        %786 = vmatmul.mubr.f32.gmra.mrb[0].mxu0 %v714
        %v787 = vpop.f32.mrb[0].mxu0
        %v788 = vadd.f32 0.0, %v787
        %v789 = vpop.f32.mrb[0].mxu0
        %790 = vmatprep.mubr.f32.mxu0 0.0
        %791 = vmatmul.mubr.f32.gmra.mrb[0].mxu0 %v715
        %v792 = vpop.f32.mrb[0].mxu0
        %v793 = vadd.f32 0.0, %v792
        %v794 = vpop.f32.mrb[0].mxu0
        %795 = vdwg.mxu0
        %v797 = vlaneseq
        %v798 = vshrl.u32 %v797, 7
        %v799 = vsub.s32 0, %v798
        %v800 = vrot.slane %v698, %v799
        %v802 = vmul.f32 %v783, %v800
        %v803 = vmul.f32 %v788, %v800
        %v804 = vmul.f32 %v793, %v800
        %v806 = vlaneseq
        %v807 = vshrl.u32 %v806, 7
        %v808 = vsub.s32 0, %v807
        %v809 = vrot.slane %v699, %v808
        %v811 = vadd.f32 %v802, %v809
        %v812 = vadd.f32 %v803, %v809
        %v813 = vadd.f32 %v804, %v809
        %v814 = vmax.f32 %v811, 0.0
        %v815 = vmax.f32 %v812, 0.0
        %v816 = vmax.f32 %v813, 0.0
        %p817 = scmp.gt.s32.totalorder %s35, 0
        %s818 = scalar_select %p817, 1, 0
        %v819 = vstv %s818
        %vm820 = vcmp.eq.s32.totalorder %v819, 1
        %vm821 = vmand %vm820, %vm710
        %vm822 = vmand %vm820, %vm711
        %vm823 = vmand %vm820, %vm712
        %v824 = vsel %vm821, %v814, 0.0
        %v825 = vsel %vm822, %v815, 0.0
        %v826 = vsel %vm823, %v816, 0.0
        %827 = vst [vmem:[#allocation2] sm:$0xff] %v824
        %828 = vst [vmem:[#allocation2 + $0x8] sm:$0xff] %v825
        %829 = vst [vmem:[#allocation2 + $0x10] sm:$0x3] %v826
        %v830 = vld [vmem:[#allocation2] ss:$2 sm:$0xff]
        %v831 = vld [vmem:[%s7] sm:$0xff]
        %v832 = vld [vmem:[%s7 + $0x8] sm:$0xff]
        %v833 = vld [vmem:[%s7 + $0x10] sm:$0xff]
        %v834 = vld [vmem:[%s7 + $0x18] sm:$0xff]
        %v835 = vld [vmem:[%s7 + $0x20] sm:$0xff]
        %v836 = vld [vmem:[%s7 + $0x28] sm:$0xff]
        %v837 = vld [vmem:[%s7 + $0x30] sm:$0xff]
        %v838 = vld [vmem:[%s7 + $0x38] sm:$0xff]
        %v839 = vld [vmem:[%s7 + $0x40] sm:$0xff]
        %v840 = vld [vmem:[%s7 + $0x48] sm:$0xff]
        %v841 = vld [vmem:[%s7 + $0x50] sm:$0xff]
        %v842 = vld [vmem:[%s7 + $0x58] sm:$0xff]
        %v843 = vld [vmem:[%s7 + $0x60] sm:$0xff]
        %v844 = vld [vmem:[%s7 + $0x68] sm:$0xff]
        %v845 = vld [vmem:[%s7 + $0x70] sm:$0xff]
        %v846 = vld [vmem:[%s7 + $0x78] sm:$0xff]
        %s847 = scalar_lea.vmem [#allocation2], 1
        %v848 = vld [vmem:[%s847] ss:$2 sm:$0xff]
        %s849 = scalar_lea.vmem %s7, 128
        %v850 = vld [vmem:[%s849] sm:$0xff]
        %v851 = vld [vmem:[%s849 + $0x8] sm:$0xff]
        %v852 = vld [vmem:[%s849 + $0x10] sm:$0xff]
        %v853 = vld [vmem:[%s849 + $0x18] sm:$0xff]
        %v854 = vld [vmem:[%s849 + $0x20] sm:$0xff]
        %v855 = vld [vmem:[%s849 + $0x28] sm:$0xff]
        %v856 = vld [vmem:[%s849 + $0x30] sm:$0xff]
        %v857 = vld [vmem:[%s849 + $0x38] sm:$0xff]
        %v858 = vld [vmem:[%s849 + $0x40] sm:$0xff]
        %v859 = vld [vmem:[%s849 + $0x48] sm:$0xff]
        %v860 = vld [vmem:[%s849 + $0x50] sm:$0xff]
        %v861 = vld [vmem:[%s849 + $0x58] sm:$0xff]
        %v862 = vld [vmem:[%s849 + $0x60] sm:$0xff]
        %v863 = vld [vmem:[%s849 + $0x68] sm:$0xff]
        %v864 = vld [vmem:[%s849 + $0x70] sm:$0xff]
        %v865 = vld [vmem:[%s849 + $0x78] sm:$0xff]
        %866 = vmatprep.subr.mxu0 0.0
        %867 = vmatpush1.msra.mxu0 %v850
        %868 = vmatprep.subr.mxu0 0.0
        %869 = vmatpush1.msra.mxu0 %v851
        %870 = vmatprep.subr.mxu0 0.0
        %871 = vmatpush1.msra.mxu0 %v852
        %872 = vmatprep.subr.mxu0 0.0
        %873 = vmatpush1.msra.mxu0 %v853
        %874 = vmatprep.subr.mxu0 0.0
        %875 = vmatpush1.msra.mxu0 %v854
        %876 = vmatprep.subr.mxu0 0.0
        %877 = vmatpush1.msra.mxu0 %v855
        %878 = vmatprep.subr.mxu0 0.0
        %879 = vmatpush1.msra.mxu0 %v856
        %880 = vmatprep.subr.mxu0 0.0
        %881 = vmatpush1.msra.mxu0 %v857
        %882 = vmatprep.subr.mxu0 0.0
        %883 = vmatpush1.msra.mxu0 %v858
        %884 = vmatprep.subr.mxu0 0.0
        %885 = vmatpush1.msra.mxu0 %v859
        %886 = vmatprep.subr.mxu0 0.0
        %887 = vmatpush1.msra.mxu0 %v860
        %888 = vmatprep.subr.mxu0 0.0
        %889 = vmatpush1.msra.mxu0 %v861
        %890 = vmatprep.subr.mxu0 0.0
        %891 = vmatpush1.msra.mxu0 %v862
        %892 = vmatprep.subr.mxu0 0.0
        %893 = vmatpush1.msra.mxu0 %v863
        %894 = vmatprep.subr.mxu0 0.0
        %895 = vmatpush1.msra.mxu0 %v864
        %896 = vmatprep.subr.mxu0 0.0
        %897 = vmatpush1.msra.mxu0 %v865
        %898 = vmatprep.subr.mxu0 0.0
        %899 = vmatpush1.msra.mxu0 0.0
        %900 = vmatprep.subr.mxu0 0.0
        %901 = vmatpush1.msra.mxu0 0.0
        %902 = vmatprep.subr.mxu0 0.0
        %903 = vmatpush1.msra.mxu0 0.0
        %904 = vmatprep.subr.mxu0 0.0
        %905 = vmatpush1.msra.mxu0 0.0
        %906 = vmatprep.subr.mxu0 0.0
        %907 = vmatpush1.msra.mxu0 0.0
        %908 = vmatprep.subr.mxu0 0.0
        %909 = vmatpush1.msra.mxu0 0.0
        %910 = vmatprep.subr.mxu0 0.0
        %911 = vmatpush1.msra.mxu0 0.0
        %912 = vmatprep.subr.mxu0 0.0
        %913 = vmatpush1.msra.mxu0 0.0
        %914 = vmatprep.subr.mxu0 0.0
        %915 = vmatpush1.msra.mxu0 0.0
        %916 = vmatprep.subr.mxu0 0.0
        %917 = vmatpush1.msra.mxu0 0.0
        %918 = vmatprep.subr.mxu0 0.0
        %919 = vmatpush1.msra.mxu0 0.0
        %920 = vmatprep.subr.mxu0 0.0
        %921 = vmatpush1.msra.mxu0 0.0
        %922 = vmatprep.subr.mxu0 0.0
        %923 = vmatpush1.msra.mxu0 0.0
        %924 = vmatprep.subr.mxu0 0.0
        %925 = vmatpush1.msra.mxu0 0.0
        %926 = vmatprep.subr.mxu0 0.0
        %927 = vmatpush1.msra.mxu0 0.0
        %928 = vmatprep.subr.mxu0 0.0
        %929 = vmatpush1.msra.mxu0 0.0
        %930 = vmatprep.mubr.f32.mxu0 0.0
        %931 = vmatmul.mubr.f32.gmra.mrb[0].mxu0 %v848
        %v932 = vpop.f32.mrb[0].mxu0
        %v933 = vadd.f32 0.0, %v932
        %v934 = vpop.f32.mrb[0].mxu0
        %935 = vdwg.mxu0
        %936 = vmatprep.subr.mxu0 0.0
        %937 = vmatpush1.msra.mxu0 %v831
        %938 = vmatprep.subr.mxu0 0.0
        %939 = vmatpush1.msra.mxu0 %v832
        %940 = vmatprep.subr.mxu0 0.0
        %941 = vmatpush1.msra.mxu0 %v833
        %942 = vmatprep.subr.mxu0 0.0
        %943 = vmatpush1.msra.mxu0 %v834
        %944 = vmatprep.subr.mxu0 0.0
        %945 = vmatpush1.msra.mxu0 %v835
        %946 = vmatprep.subr.mxu0 0.0
        %947 = vmatpush1.msra.mxu0 %v836
        %948 = vmatprep.subr.mxu0 0.0
        %949 = vmatpush1.msra.mxu0 %v837
        %950 = vmatprep.subr.mxu0 0.0
        %951 = vmatpush1.msra.mxu0 %v838
        %952 = vmatprep.subr.mxu0 0.0
        %953 = vmatpush1.msra.mxu0 %v839
        %954 = vmatprep.subr.mxu0 0.0
        %955 = vmatpush1.msra.mxu0 %v840
        %956 = vmatprep.subr.mxu0 0.0
        %957 = vmatpush1.msra.mxu0 %v841
        %958 = vmatprep.subr.mxu0 0.0
        %959 = vmatpush1.msra.mxu0 %v842
        %960 = vmatprep.subr.mxu0 0.0
        %961 = vmatpush1.msra.mxu0 %v843
        %962 = vmatprep.subr.mxu0 0.0
        %963 = vmatpush1.msra.mxu0 %v844
        %964 = vmatprep.subr.mxu0 0.0
        %965 = vmatpush1.msra.mxu0 %v845
        %966 = vmatprep.subr.mxu0 0.0
        %967 = vmatpush1.msra.mxu0 %v846
        %968 = vmatprep.subr.mxu0 0.0
        %969 = vmatpush1.msra.mxu0 0.0
        %970 = vmatprep.subr.mxu0 0.0
        %971 = vmatpush1.msra.mxu0 0.0
        %972 = vmatprep.subr.mxu0 0.0
        %973 = vmatpush1.msra.mxu0 0.0
        %974 = vmatprep.subr.mxu0 0.0
        %975 = vmatpush1.msra.mxu0 0.0
        %976 = vmatprep.subr.mxu0 0.0
        %977 = vmatpush1.msra.mxu0 0.0
        %978 = vmatprep.subr.mxu0 0.0
        %979 = vmatpush1.msra.mxu0 0.0
        %980 = vmatprep.subr.mxu0 0.0
        %981 = vmatpush1.msra.mxu0 0.0
        %982 = vmatprep.subr.mxu0 0.0
        %983 = vmatpush1.msra.mxu0 0.0
        %984 = vmatprep.subr.mxu0 0.0
        %985 = vmatpush1.msra.mxu0 0.0
        %986 = vmatprep.subr.mxu0 0.0
        %987 = vmatpush1.msra.mxu0 0.0
        %988 = vmatprep.subr.mxu0 0.0
        %989 = vmatpush1.msra.mxu0 0.0
        %990 = vmatprep.subr.mxu0 0.0
        %991 = vmatpush1.msra.mxu0 0.0
        %992 = vmatprep.subr.mxu0 0.0
        %993 = vmatpush1.msra.mxu0 0.0
        %994 = vmatprep.subr.mxu0 0.0
        %995 = vmatpush1.msra.mxu0 0.0
        %996 = vmatprep.subr.mxu0 0.0
        %997 = vmatpush1.msra.mxu0 0.0
        %998 = vmatprep.subr.mxu0 0.0
        %999 = vmatpush1.msra.mxu0 0.0
        %1000 = vmatprep.mubr.f32.mxu0 0.0
        %1001 = vmatmul.mubr.f32.gmra.mrb[0].mxu0 %v830
        %v1002 = vpop.f32.mrb[0].mxu0
        %v1003 = vadd.f32 %v933, %v1002
        %v1004 = vpop.f32.mrb[0].mxu0
        %1005 = vdwg.mxu0
        %s1006 = scalar_lea.vmem [#allocation2], 2
        %v1007 = vld [vmem:[%s1006] ss:$2 sm:$0xff]
        %s1008 = scalar_lea.vmem %s7, 256
        %v1009 = vld [vmem:[%s1008] sm:$0xff]
        %v1010 = vld [vmem:[%s1008 + $0x8] sm:$0xff]
        %v1011 = vld [vmem:[%s1008 + $0x10] sm:$0xff]
        %v1012 = vld [vmem:[%s1008 + $0x18] sm:$0xff]
        %v1013 = vld [vmem:[%s1008 + $0x20] sm:$0xff]
        %v1014 = vld [vmem:[%s1008 + $0x28] sm:$0xff]
        %v1015 = vld [vmem:[%s1008 + $0x30] sm:$0xff]
        %v1016 = vld [vmem:[%s1008 + $0x38] sm:$0xff]
        %v1017 = vld [vmem:[%s1008 + $0x40] sm:$0xff]
        %v1018 = vld [vmem:[%s1008 + $0x48] sm:$0xff]
        %v1019 = vld [vmem:[%s1008 + $0x50] sm:$0xff]
        %v1020 = vld [vmem:[%s1008 + $0x58] sm:$0xff]
        %v1021 = vld [vmem:[%s1008 + $0x60] sm:$0xff]
        %v1022 = vld [vmem:[%s1008 + $0x68] sm:$0xff]
        %v1023 = vld [vmem:[%s1008 + $0x70] sm:$0xff]
        %v1024 = vld [vmem:[%s1008 + $0x78] sm:$0xff]
        %1025 = vmatprep.subr.mxu0 0.0
        %1026 = vmatpush1.msra.mxu0 %v1009
        %1027 = vmatprep.subr.mxu0 0.0
        %1028 = vmatpush1.msra.mxu0 %v1010
        %1029 = vmatprep.subr.mxu0 0.0
        %1030 = vmatpush1.msra.mxu0 %v1011
        %1031 = vmatprep.subr.mxu0 0.0
        %1032 = vmatpush1.msra.mxu0 %v1012
        %1033 = vmatprep.subr.mxu0 0.0
        %1034 = vmatpush1.msra.mxu0 %v1013
        %1035 = vmatprep.subr.mxu0 0.0
        %1036 = vmatpush1.msra.mxu0 %v1014
        %1037 = vmatprep.subr.mxu0 0.0
        %1038 = vmatpush1.msra.mxu0 %v1015
        %1039 = vmatprep.subr.mxu0 0.0
        %1040 = vmatpush1.msra.mxu0 %v1016
        %1041 = vmatprep.subr.mxu0 0.0
        %1042 = vmatpush1.msra.mxu0 %v1017
        %1043 = vmatprep.subr.mxu0 0.0
        %1044 = vmatpush1.msra.mxu0 %v1018
        %1045 = vmatprep.subr.mxu0 0.0
        %1046 = vmatpush1.msra.mxu0 %v1019
        %1047 = vmatprep.subr.mxu0 0.0
        %1048 = vmatpush1.msra.mxu0 %v1020
        %1049 = vmatprep.subr.mxu0 0.0
        %1050 = vmatpush1.msra.mxu0 %v1021
        %1051 = vmatprep.subr.mxu0 0.0
        %1052 = vmatpush1.msra.mxu0 %v1022
        %1053 = vmatprep.subr.mxu0 0.0
        %1054 = vmatpush1.msra.mxu0 %v1023
        %1055 = vmatprep.subr.mxu0 0.0
        %1056 = vmatpush1.msra.mxu0 %v1024
        %1057 = vmatprep.subr.mxu0 0.0
        %1058 = vmatpush1.msra.mxu0 0.0
        %1059 = vmatprep.subr.mxu0 0.0
        %1060 = vmatpush1.msra.mxu0 0.0
        %1061 = vmatprep.subr.mxu0 0.0
        %1062 = vmatpush1.msra.mxu0 0.0
        %1063 = vmatprep.subr.mxu0 0.0
        %1064 = vmatpush1.msra.mxu0 0.0
        %1065 = vmatprep.subr.mxu0 0.0
        %1066 = vmatpush1.msra.mxu0 0.0
        %1067 = vmatprep.subr.mxu0 0.0
        %1068 = vmatpush1.msra.mxu0 0.0
        %1069 = vmatprep.subr.mxu0 0.0
        %1070 = vmatpush1.msra.mxu0 0.0
        %1071 = vmatprep.subr.mxu0 0.0
        %1072 = vmatpush1.msra.mxu0 0.0
        %1073 = vmatprep.subr.mxu0 0.0
        %1074 = vmatpush1.msra.mxu0 0.0
        %1075 = vmatprep.subr.mxu0 0.0
        %1076 = vmatpush1.msra.mxu0 0.0
        %1077 = vmatprep.subr.mxu0 0.0
        %1078 = vmatpush1.msra.mxu0 0.0
        %1079 = vmatprep.subr.mxu0 0.0
        %1080 = vmatpush1.msra.mxu0 0.0
        %1081 = vmatprep.subr.mxu0 0.0
        %1082 = vmatpush1.msra.mxu0 0.0
        %1083 = vmatprep.subr.mxu0 0.0
        %1084 = vmatpush1.msra.mxu0 0.0
        %1085 = vmatprep.subr.mxu0 0.0
        %1086 = vmatpush1.msra.mxu0 0.0
        %1087 = vmatprep.subr.mxu0 0.0
        %1088 = vmatpush1.msra.mxu0 0.0
        %1089 = vmatprep.mubr.f32.mxu0 0.0
        %1090 = vmatmul.mubr.f32.gmra.mrb[0].mxu0 %v1007
        %v1091 = vpop.f32.mrb[0].mxu0
        %v1092 = vadd.f32 0.0, %v1091
        %v1093 = vpop.f32.mrb[0].mxu0
        %1094 = vdwg.mxu0
        %v1095 = vadd.f32 %v1003, %v1092
        %v1096 = vld [vmem:[%s658] sm:$0xff]
        %v1097 = vld [vmem:[%s658 + $0x8] sm:$0xff]
        %v1098 = vld [vmem:[%s658 + $0x10] sm:$0x3]
        %1099 = vmatprep.subr.mxu0 0.0
        %1100 = vmatpush1.msra.mxu0 %v682
        %1101 = vmatprep.subr.mxu0 0.0
        %1102 = vmatpush1.msra.mxu0 %v683
        %1103 = vmatprep.subr.mxu0 0.0
        %1104 = vmatpush1.msra.mxu0 %v684
        %1105 = vmatprep.subr.mxu0 0.0
        %1106 = vmatpush1.msra.mxu0 %v685
        %1107 = vmatprep.subr.mxu0 0.0
        %1108 = vmatpush1.msra.mxu0 %v686
        %1109 = vmatprep.subr.mxu0 0.0
        %1110 = vmatpush1.msra.mxu0 %v687
        %1111 = vmatprep.subr.mxu0 0.0
        %1112 = vmatpush1.msra.mxu0 %v688
        %1113 = vmatprep.subr.mxu0 0.0
        %1114 = vmatpush1.msra.mxu0 %v689
        %1115 = vmatprep.subr.mxu0 0.0
        %1116 = vmatpush1.msra.mxu0 %v690
        %1117 = vmatprep.subr.mxu0 0.0
        %1118 = vmatpush1.msra.mxu0 %v691
        %1119 = vmatprep.subr.mxu0 0.0
        %1120 = vmatpush1.msra.mxu0 %v692
        %1121 = vmatprep.subr.mxu0 0.0
        %1122 = vmatpush1.msra.mxu0 %v693
        %1123 = vmatprep.subr.mxu0 0.0
        %1124 = vmatpush1.msra.mxu0 %v694
        %1125 = vmatprep.subr.mxu0 0.0
        %1126 = vmatpush1.msra.mxu0 %v695
        %1127 = vmatprep.subr.mxu0 0.0
        %1128 = vmatpush1.msra.mxu0 %v696
        %1129 = vmatprep.subr.mxu0 0.0
        %1130 = vmatpush1.msra.mxu0 %v697
        %1131 = vmatprep.subr.mxu0 0.0
        %1132 = vmatpush1.msra.mxu0 0.0
        %1133 = vmatprep.subr.mxu0 0.0
        %1134 = vmatpush1.msra.mxu0 0.0
        %1135 = vmatprep.subr.mxu0 0.0
        %1136 = vmatpush1.msra.mxu0 0.0
        %1137 = vmatprep.subr.mxu0 0.0
        %1138 = vmatpush1.msra.mxu0 0.0
        %1139 = vmatprep.subr.mxu0 0.0
        %1140 = vmatpush1.msra.mxu0 0.0
        %1141 = vmatprep.subr.mxu0 0.0
        %1142 = vmatpush1.msra.mxu0 0.0
        %1143 = vmatprep.subr.mxu0 0.0
        %1144 = vmatpush1.msra.mxu0 0.0
        %1145 = vmatprep.subr.mxu0 0.0
        %1146 = vmatpush1.msra.mxu0 0.0
        %1147 = vmatprep.subr.mxu0 0.0
        %1148 = vmatpush1.msra.mxu0 0.0
        %1149 = vmatprep.subr.mxu0 0.0
        %1150 = vmatpush1.msra.mxu0 0.0
        %1151 = vmatprep.subr.mxu0 0.0
        %1152 = vmatpush1.msra.mxu0 0.0
        %1153 = vmatprep.subr.mxu0 0.0
        %1154 = vmatpush1.msra.mxu0 0.0
        %1155 = vmatprep.subr.mxu0 0.0
        %1156 = vmatpush1.msra.mxu0 0.0
        %1157 = vmatprep.subr.mxu0 0.0
        %1158 = vmatpush1.msra.mxu0 0.0
        %1159 = vmatprep.subr.mxu0 0.0
        %1160 = vmatpush1.msra.mxu0 0.0
        %1161 = vmatprep.subr.mxu0 0.0
        %1162 = vmatpush1.msra.mxu0 0.0
        %1163 = vmatprep.mubr.f32.mxu0 0.0
        %1164 = vmatmul.mubr.f32.gmra.mrb[0].mxu0 %v1096
        %v1165 = vpop.f32.mrb[0].mxu0
        %v1166 = vadd.f32 0.0, %v1165
        %v1167 = vpop.f32.mrb[0].mxu0
        %1168 = vmatprep.mubr.f32.mxu0 0.0
        %1169 = vmatmul.mubr.f32.gmra.mrb[0].mxu0 %v1097
        %v1170 = vpop.f32.mrb[0].mxu0
        %v1171 = vadd.f32 0.0, %v1170
        %v1172 = vpop.f32.mrb[0].mxu0
        %1173 = vmatprep.mubr.f32.mxu0 0.0
        %1174 = vmatmul.mubr.f32.gmra.mrb[0].mxu0 %v1098
        %v1175 = vpop.f32.mrb[0].mxu0
        %v1176 = vadd.f32 0.0, %v1175
        %v1177 = vpop.f32.mrb[0].mxu0
        %1178 = vdwg.mxu0
        %v1179 = vmul.f32 %v1166, %v800
        %v1180 = vmul.f32 %v1171, %v800
        %v1181 = vmul.f32 %v1176, %v800
        %v1182 = vadd.f32 %v1179, %v809
        %v1183 = vadd.f32 %v1180, %v809
        %v1184 = vadd.f32 %v1181, %v809
        %v1185 = vmax.f32 %v1182, 0.0
        %v1186 = vmax.f32 %v1183, 0.0
        %v1187 = vmax.f32 %v1184, 0.0
        %v1188 = vsel %vm710, %v1185, 0.0
        %v1189 = vsel %vm711, %v1186, 0.0
        %v1190 = vsel %vm712, %v1187, 0.0
        %1191 = vst [vmem:[#allocation2] sm:$0xff] %v1188
        %1192 = vst [vmem:[#allocation2 + $0x8] sm:$0xff] %v1189
        %1193 = vst [vmem:[#allocation2 + $0x10] sm:$0x3] %v1190
        %v1194 = vld [vmem:[#allocation2] ss:$2 sm:$0xff]
        %s1195 = scalar_lea.vmem %s7, 384
        %v1196 = vld [vmem:[%s1195] sm:$0xff]
        %v1197 = vld [vmem:[%s1195 + $0x8] sm:$0xff]
        %v1198 = vld [vmem:[%s1195 + $0x10] sm:$0xff]
        %v1199 = vld [vmem:[%s1195 + $0x18] sm:$0xff]
        %v1200 = vld [vmem:[%s1195 + $0x20] sm:$0xff]
        %v1201 = vld [vmem:[%s1195 + $0x28] sm:$0xff]
        %v1202 = vld [vmem:[%s1195 + $0x30] sm:$0xff]
        %v1203 = vld [vmem:[%s1195 + $0x38] sm:$0xff]
        %v1204 = vld [vmem:[%s1195 + $0x40] sm:$0xff]
        %v1205 = vld [vmem:[%s1195 + $0x48] sm:$0xff]
        %v1206 = vld [vmem:[%s1195 + $0x50] sm:$0xff]
        %v1207 = vld [vmem:[%s1195 + $0x58] sm:$0xff]
        %v1208 = vld [vmem:[%s1195 + $0x60] sm:$0xff]
        %v1209 = vld [vmem:[%s1195 + $0x68] sm:$0xff]
        %v1210 = vld [vmem:[%s1195 + $0x70] sm:$0xff]
        %v1211 = vld [vmem:[%s1195 + $0x78] sm:$0xff]
        %1212 = vmatprep.subr.mxu0 0.0
        %1213 = vmatpush1.msra.mxu0 %v1196
        %1214 = vmatprep.subr.mxu0 0.0
        %1215 = vmatpush1.msra.mxu0 %v1197
        %1216 = vmatprep.subr.mxu0 0.0
        %1217 = vmatpush1.msra.mxu0 %v1198
        %1218 = vmatprep.subr.mxu0 0.0
        %1219 = vmatpush1.msra.mxu0 %v1199
        %1220 = vmatprep.subr.mxu0 0.0
        %1221 = vmatpush1.msra.mxu0 %v1200
        %1222 = vmatprep.subr.mxu0 0.0
        %1223 = vmatpush1.msra.mxu0 %v1201
        %1224 = vmatprep.subr.mxu0 0.0
        %1225 = vmatpush1.msra.mxu0 %v1202
        %1226 = vmatprep.subr.mxu0 0.0
        %1227 = vmatpush1.msra.mxu0 %v1203
        %1228 = vmatprep.subr.mxu0 0.0
        %1229 = vmatpush1.msra.mxu0 %v1204
        %1230 = vmatprep.subr.mxu0 0.0
        %1231 = vmatpush1.msra.mxu0 %v1205
        %1232 = vmatprep.subr.mxu0 0.0
        %1233 = vmatpush1.msra.mxu0 %v1206
        %1234 = vmatprep.subr.mxu0 0.0
        %1235 = vmatpush1.msra.mxu0 %v1207
        %1236 = vmatprep.subr.mxu0 0.0
        %1237 = vmatpush1.msra.mxu0 %v1208
        %1238 = vmatprep.subr.mxu0 0.0
        %1239 = vmatpush1.msra.mxu0 %v1209
        %1240 = vmatprep.subr.mxu0 0.0
        %1241 = vmatpush1.msra.mxu0 %v1210
        %1242 = vmatprep.subr.mxu0 0.0
        %1243 = vmatpush1.msra.mxu0 %v1211
        %1244 = vmatprep.subr.mxu0 0.0
        %1245 = vmatpush1.msra.mxu0 0.0
        %1246 = vmatprep.subr.mxu0 0.0
        %1247 = vmatpush1.msra.mxu0 0.0
        %1248 = vmatprep.subr.mxu0 0.0
        %1249 = vmatpush1.msra.mxu0 0.0
        %1250 = vmatprep.subr.mxu0 0.0
        %1251 = vmatpush1.msra.mxu0 0.0
        %1252 = vmatprep.subr.mxu0 0.0
        %1253 = vmatpush1.msra.mxu0 0.0
        %1254 = vmatprep.subr.mxu0 0.0
        %1255 = vmatpush1.msra.mxu0 0.0
        %1256 = vmatprep.subr.mxu0 0.0
        %1257 = vmatpush1.msra.mxu0 0.0
        %1258 = vmatprep.subr.mxu0 0.0
        %1259 = vmatpush1.msra.mxu0 0.0
        %1260 = vmatprep.subr.mxu0 0.0
        %1261 = vmatpush1.msra.mxu0 0.0
        %1262 = vmatprep.subr.mxu0 0.0
        %1263 = vmatpush1.msra.mxu0 0.0
        %1264 = vmatprep.subr.mxu0 0.0
        %1265 = vmatpush1.msra.mxu0 0.0
        %1266 = vmatprep.subr.mxu0 0.0
        %1267 = vmatpush1.msra.mxu0 0.0
        %1268 = vmatprep.subr.mxu0 0.0
        %1269 = vmatpush1.msra.mxu0 0.0
        %1270 = vmatprep.subr.mxu0 0.0
        %1271 = vmatpush1.msra.mxu0 0.0
        %1272 = vmatprep.subr.mxu0 0.0
        %1273 = vmatpush1.msra.mxu0 0.0
        %1274 = vmatprep.subr.mxu0 0.0
        %1275 = vmatpush1.msra.mxu0 0.0
        %1276 = vmatprep.mubr.f32.mxu0 0.0
        %1277 = vmatmul.mubr.f32.gmra.mrb[0].mxu0 %v1194
        %v1278 = vpop.f32.mrb[0].mxu0
        %v1279 = vadd.f32 0.0, %v1278
        %v1280 = vpop.f32.mrb[0].mxu0
        %1281 = vdwg.mxu0
        %v1282 = vadd.f32 %v1095, %v1279
        %v1283 = vld [vmem:[%s847] ss:$2 sm:$0xff]
        %s1284 = scalar_lea.vmem %s7, 512
        %v1285 = vld [vmem:[%s1284] sm:$0xff]
        %v1286 = vld [vmem:[%s1284 + $0x8] sm:$0xff]
        %v1287 = vld [vmem:[%s1284 + $0x10] sm:$0xff]
        %v1288 = vld [vmem:[%s1284 + $0x18] sm:$0xff]
        %v1289 = vld [vmem:[%s1284 + $0x20] sm:$0xff]
        %v1290 = vld [vmem:[%s1284 + $0x28] sm:$0xff]
        %v1291 = vld [vmem:[%s1284 + $0x30] sm:$0xff]
        %v1292 = vld [vmem:[%s1284 + $0x38] sm:$0xff]
        %v1293 = vld [vmem:[%s1284 + $0x40] sm:$0xff]
        %v1294 = vld [vmem:[%s1284 + $0x48] sm:$0xff]
        %v1295 = vld [vmem:[%s1284 + $0x50] sm:$0xff]
        %v1296 = vld [vmem:[%s1284 + $0x58] sm:$0xff]
        %v1297 = vld [vmem:[%s1284 + $0x60] sm:$0xff]
        %v1298 = vld [vmem:[%s1284 + $0x68] sm:$0xff]
        %v1299 = vld [vmem:[%s1284 + $0x70] sm:$0xff]
        %v1300 = vld [vmem:[%s1284 + $0x78] sm:$0xff]
        %1301 = vmatprep.subr.mxu0 0.0
        %1302 = vmatpush1.msra.mxu0 %v1285
        %1303 = vmatprep.subr.mxu0 0.0
        %1304 = vmatpush1.msra.mxu0 %v1286
        %1305 = vmatprep.subr.mxu0 0.0
        %1306 = vmatpush1.msra.mxu0 %v1287
        %1307 = vmatprep.subr.mxu0 0.0
        %1308 = vmatpush1.msra.mxu0 %v1288
        %1309 = vmatprep.subr.mxu0 0.0
        %1310 = vmatpush1.msra.mxu0 %v1289
        %1311 = vmatprep.subr.mxu0 0.0
        %1312 = vmatpush1.msra.mxu0 %v1290
        %1313 = vmatprep.subr.mxu0 0.0
        %1314 = vmatpush1.msra.mxu0 %v1291
        %1315 = vmatprep.subr.mxu0 0.0
        %1316 = vmatpush1.msra.mxu0 %v1292
        %1317 = vmatprep.subr.mxu0 0.0
        %1318 = vmatpush1.msra.mxu0 %v1293
        %1319 = vmatprep.subr.mxu0 0.0
        %1320 = vmatpush1.msra.mxu0 %v1294
        %1321 = vmatprep.subr.mxu0 0.0
        %1322 = vmatpush1.msra.mxu0 %v1295
        %1323 = vmatprep.subr.mxu0 0.0
        %1324 = vmatpush1.msra.mxu0 %v1296
        %1325 = vmatprep.subr.mxu0 0.0
        %1326 = vmatpush1.msra.mxu0 %v1297
        %1327 = vmatprep.subr.mxu0 0.0
        %1328 = vmatpush1.msra.mxu0 %v1298
        %1329 = vmatprep.subr.mxu0 0.0
        %1330 = vmatpush1.msra.mxu0 %v1299
        %1331 = vmatprep.subr.mxu0 0.0
        %1332 = vmatpush1.msra.mxu0 %v1300
        %1333 = vmatprep.subr.mxu0 0.0
        %1334 = vmatpush1.msra.mxu0 0.0
        %1335 = vmatprep.subr.mxu0 0.0
        %1336 = vmatpush1.msra.mxu0 0.0
        %1337 = vmatprep.subr.mxu0 0.0
        %1338 = vmatpush1.msra.mxu0 0.0
        %1339 = vmatprep.subr.mxu0 0.0
        %1340 = vmatpush1.msra.mxu0 0.0
        %1341 = vmatprep.subr.mxu0 0.0
        %1342 = vmatpush1.msra.mxu0 0.0
        %1343 = vmatprep.subr.mxu0 0.0
        %1344 = vmatpush1.msra.mxu0 0.0
        %1345 = vmatprep.subr.mxu0 0.0
        %1346 = vmatpush1.msra.mxu0 0.0
        %1347 = vmatprep.subr.mxu0 0.0
        %1348 = vmatpush1.msra.mxu0 0.0
        %1349 = vmatprep.subr.mxu0 0.0
        %1350 = vmatpush1.msra.mxu0 0.0
        %1351 = vmatprep.subr.mxu0 0.0
        %1352 = vmatpush1.msra.mxu0 0.0
        %1353 = vmatprep.subr.mxu0 0.0
        %1354 = vmatpush1.msra.mxu0 0.0
        %1355 = vmatprep.subr.mxu0 0.0
        %1356 = vmatpush1.msra.mxu0 0.0
        %1357 = vmatprep.subr.mxu0 0.0
        %1358 = vmatpush1.msra.mxu0 0.0
        %1359 = vmatprep.subr.mxu0 0.0
        %1360 = vmatpush1.msra.mxu0 0.0
        %1361 = vmatprep.subr.mxu0 0.0
        %1362 = vmatpush1.msra.mxu0 0.0
        %1363 = vmatprep.subr.mxu0 0.0
        %1364 = vmatpush1.msra.mxu0 0.0
        %1365 = vmatprep.mubr.f32.mxu0 0.0
        %1366 = vmatmul.mubr.f32.gmra.mrb[0].mxu0 %v1283
        %v1367 = vpop.f32.mrb[0].mxu0
        %v1368 = vadd.f32 0.0, %v1367
        %v1369 = vpop.f32.mrb[0].mxu0
        %1370 = vdwg.mxu0
        %v1371 = vadd.f32 %v1282, %v1368
        %v1372 = vld [vmem:[%s1006] ss:$2 sm:$0xff]
        %s1373 = scalar_lea.vmem %s7, 640
        %v1374 = vld [vmem:[%s1373] sm:$0xff]
        %v1375 = vld [vmem:[%s1373 + $0x8] sm:$0xff]
        %v1376 = vld [vmem:[%s1373 + $0x10] sm:$0xff]
        %v1377 = vld [vmem:[%s1373 + $0x18] sm:$0xff]
        %v1378 = vld [vmem:[%s1373 + $0x20] sm:$0xff]
        %v1379 = vld [vmem:[%s1373 + $0x28] sm:$0xff]
        %v1380 = vld [vmem:[%s1373 + $0x30] sm:$0xff]
        %v1381 = vld [vmem:[%s1373 + $0x38] sm:$0xff]
        %v1382 = vld [vmem:[%s1373 + $0x40] sm:$0xff]
        %v1383 = vld [vmem:[%s1373 + $0x48] sm:$0xff]
        %v1384 = vld [vmem:[%s1373 + $0x50] sm:$0xff]
        %v1385 = vld [vmem:[%s1373 + $0x58] sm:$0xff]
        %v1386 = vld [vmem:[%s1373 + $0x60] sm:$0xff]
        %v1387 = vld [vmem:[%s1373 + $0x68] sm:$0xff]
        %v1388 = vld [vmem:[%s1373 + $0x70] sm:$0xff]
        %v1389 = vld [vmem:[%s1373 + $0x78] sm:$0xff]
        %1390 = vmatprep.subr.mxu0 0.0
        %1391 = vmatpush1.msra.mxu0 %v1374
        %1392 = vmatprep.subr.mxu0 0.0
        %1393 = vmatpush1.msra.mxu0 %v1375
        %1394 = vmatprep.subr.mxu0 0.0
        %1395 = vmatpush1.msra.mxu0 %v1376
        %1396 = vmatprep.subr.mxu0 0.0
        %1397 = vmatpush1.msra.mxu0 %v1377
        %1398 = vmatprep.subr.mxu0 0.0
        %1399 = vmatpush1.msra.mxu0 %v1378
        %1400 = vmatprep.subr.mxu0 0.0
        %1401 = vmatpush1.msra.mxu0 %v1379
        %1402 = vmatprep.subr.mxu0 0.0
        %1403 = vmatpush1.msra.mxu0 %v1380
        %1404 = vmatprep.subr.mxu0 0.0
        %1405 = vmatpush1.msra.mxu0 %v1381
        %1406 = vmatprep.subr.mxu0 0.0
        %1407 = vmatpush1.msra.mxu0 %v1382
        %1408 = vmatprep.subr.mxu0 0.0
        %1409 = vmatpush1.msra.mxu0 %v1383
        %1410 = vmatprep.subr.mxu0 0.0
        %1411 = vmatpush1.msra.mxu0 %v1384
        %1412 = vmatprep.subr.mxu0 0.0
        %1413 = vmatpush1.msra.mxu0 %v1385
        %1414 = vmatprep.subr.mxu0 0.0
        %1415 = vmatpush1.msra.mxu0 %v1386
        %1416 = vmatprep.subr.mxu0 0.0
        %1417 = vmatpush1.msra.mxu0 %v1387
        %1418 = vmatprep.subr.mxu0 0.0
        %1419 = vmatpush1.msra.mxu0 %v1388
        %1420 = vmatprep.subr.mxu0 0.0
        %1421 = vmatpush1.msra.mxu0 %v1389
        %1422 = vmatprep.subr.mxu0 0.0
        %1423 = vmatpush1.msra.mxu0 0.0
        %1424 = vmatprep.subr.mxu0 0.0
        %1425 = vmatpush1.msra.mxu0 0.0
        %1426 = vmatprep.subr.mxu0 0.0
        %1427 = vmatpush1.msra.mxu0 0.0
        %1428 = vmatprep.subr.mxu0 0.0
        %1429 = vmatpush1.msra.mxu0 0.0
        %1430 = vmatprep.subr.mxu0 0.0
        %1431 = vmatpush1.msra.mxu0 0.0
        %1432 = vmatprep.subr.mxu0 0.0
        %1433 = vmatpush1.msra.mxu0 0.0
        %1434 = vmatprep.subr.mxu0 0.0
        %1435 = vmatpush1.msra.mxu0 0.0
        %1436 = vmatprep.subr.mxu0 0.0
        %1437 = vmatpush1.msra.mxu0 0.0
        %1438 = vmatprep.subr.mxu0 0.0
        %1439 = vmatpush1.msra.mxu0 0.0
        %1440 = vmatprep.subr.mxu0 0.0
        %1441 = vmatpush1.msra.mxu0 0.0
        %1442 = vmatprep.subr.mxu0 0.0
        %1443 = vmatpush1.msra.mxu0 0.0
        %1444 = vmatprep.subr.mxu0 0.0
        %1445 = vmatpush1.msra.mxu0 0.0
        %1446 = vmatprep.subr.mxu0 0.0
        %1447 = vmatpush1.msra.mxu0 0.0
        %1448 = vmatprep.subr.mxu0 0.0
        %1449 = vmatpush1.msra.mxu0 0.0
        %1450 = vmatprep.subr.mxu0 0.0
        %1451 = vmatpush1.msra.mxu0 0.0
        %1452 = vmatprep.subr.mxu0 0.0
        %1453 = vmatpush1.msra.mxu0 0.0
        %1454 = vmatprep.mubr.f32.mxu0 0.0
        %1455 = vmatmul.mubr.f32.gmra.mrb[0].mxu0 %v1372
        %v1456 = vpop.f32.mrb[0].mxu0
        %v1457 = vadd.f32 0.0, %v1456
        %v1458 = vpop.f32.mrb[0].mxu0
        %1459 = vdwg.mxu0
        %v1460 = vadd.f32 %v1371, %v1457
        %v1461 = vld [vmem:[%s671] sm:$0xff]
        %v1462 = vld [vmem:[%s671 + $0x8] sm:$0xff]
        %v1463 = vld [vmem:[%s671 + $0x10] sm:$0x3]
        %1464 = vmatprep.subr.mxu0 0.0
        %1465 = vmatpush1.msra.mxu0 %v682
        %1466 = vmatprep.subr.mxu0 0.0
        %1467 = vmatpush1.msra.mxu0 %v683
        %1468 = vmatprep.subr.mxu0 0.0
        %1469 = vmatpush1.msra.mxu0 %v684
        %1470 = vmatprep.subr.mxu0 0.0
        %1471 = vmatpush1.msra.mxu0 %v685
        %1472 = vmatprep.subr.mxu0 0.0
        %1473 = vmatpush1.msra.mxu0 %v686
        %1474 = vmatprep.subr.mxu0 0.0
        %1475 = vmatpush1.msra.mxu0 %v687
        %1476 = vmatprep.subr.mxu0 0.0
        %1477 = vmatpush1.msra.mxu0 %v688
        %1478 = vmatprep.subr.mxu0 0.0
        %1479 = vmatpush1.msra.mxu0 %v689
        %1480 = vmatprep.subr.mxu0 0.0
        %1481 = vmatpush1.msra.mxu0 %v690
        %1482 = vmatprep.subr.mxu0 0.0
        %1483 = vmatpush1.msra.mxu0 %v691
        %1484 = vmatprep.subr.mxu0 0.0
        %1485 = vmatpush1.msra.mxu0 %v692
        %1486 = vmatprep.subr.mxu0 0.0
        %1487 = vmatpush1.msra.mxu0 %v693
        %1488 = vmatprep.subr.mxu0 0.0
        %1489 = vmatpush1.msra.mxu0 %v694
        %1490 = vmatprep.subr.mxu0 0.0
        %1491 = vmatpush1.msra.mxu0 %v695
        %1492 = vmatprep.subr.mxu0 0.0
        %1493 = vmatpush1.msra.mxu0 %v696
        %1494 = vmatprep.subr.mxu0 0.0
        %1495 = vmatpush1.msra.mxu0 %v697
        %1496 = vmatprep.subr.mxu0 0.0
        %1497 = vmatpush1.msra.mxu0 0.0
        %1498 = vmatprep.subr.mxu0 0.0
        %1499 = vmatpush1.msra.mxu0 0.0
        %1500 = vmatprep.subr.mxu0 0.0
        %1501 = vmatpush1.msra.mxu0 0.0
        %1502 = vmatprep.subr.mxu0 0.0
        %1503 = vmatpush1.msra.mxu0 0.0
        %1504 = vmatprep.subr.mxu0 0.0
        %1505 = vmatpush1.msra.mxu0 0.0
        %1506 = vmatprep.subr.mxu0 0.0
        %1507 = vmatpush1.msra.mxu0 0.0
        %1508 = vmatprep.subr.mxu0 0.0
        %1509 = vmatpush1.msra.mxu0 0.0
        %1510 = vmatprep.subr.mxu0 0.0
        %1511 = vmatpush1.msra.mxu0 0.0
        %1512 = vmatprep.subr.mxu0 0.0
        %1513 = vmatpush1.msra.mxu0 0.0
        %1514 = vmatprep.subr.mxu0 0.0
        %1515 = vmatpush1.msra.mxu0 0.0
        %1516 = vmatprep.subr.mxu0 0.0
        %1517 = vmatpush1.msra.mxu0 0.0
        %1518 = vmatprep.subr.mxu0 0.0
        %1519 = vmatpush1.msra.mxu0 0.0
        %1520 = vmatprep.subr.mxu0 0.0
        %1521 = vmatpush1.msra.mxu0 0.0
        %1522 = vmatprep.subr.mxu0 0.0
        %1523 = vmatpush1.msra.mxu0 0.0
        %1524 = vmatprep.subr.mxu0 0.0
        %1525 = vmatpush1.msra.mxu0 0.0
        %1526 = vmatprep.subr.mxu0 0.0
        %1527 = vmatpush1.msra.mxu0 0.0
        %1528 = vmatprep.mubr.f32.mxu0 0.0
        %1529 = vmatmul.mubr.f32.gmra.mrb[0].mxu0 %v1461
        %v1530 = vpop.f32.mrb[0].mxu0
        %v1531 = vadd.f32 0.0, %v1530
        %v1532 = vpop.f32.mrb[0].mxu0
        %1533 = vmatprep.mubr.f32.mxu0 0.0
        %1534 = vmatmul.mubr.f32.gmra.mrb[0].mxu0 %v1462
        %v1535 = vpop.f32.mrb[0].mxu0
        %v1536 = vadd.f32 0.0, %v1535
        %v1537 = vpop.f32.mrb[0].mxu0
        %1538 = vmatprep.mubr.f32.mxu0 0.0
        %1539 = vmatmul.mubr.f32.gmra.mrb[0].mxu0 %v1463
        %v1540 = vpop.f32.mrb[0].mxu0
        %v1541 = vadd.f32 0.0, %v1540
        %v1542 = vpop.f32.mrb[0].mxu0
        %1543 = vdwg.mxu0
        %v1544 = vmul.f32 %v1531, %v800
        %v1545 = vmul.f32 %v1536, %v800
        %v1546 = vmul.f32 %v1541, %v800
        %v1547 = vadd.f32 %v1544, %v809
        %v1548 = vadd.f32 %v1545, %v809
        %v1549 = vadd.f32 %v1546, %v809
        %v1550 = vmax.f32 %v1547, 0.0
        %v1551 = vmax.f32 %v1548, 0.0
        %v1552 = vmax.f32 %v1549, 0.0
        %v1553 = vsel %vm710, %v1550, 0.0
        %v1554 = vsel %vm711, %v1551, 0.0
        %v1555 = vsel %vm712, %v1552, 0.0
        %1556 = vst [vmem:[#allocation2] sm:$0xff] %v1553
        %1557 = vst [vmem:[#allocation2 + $0x8] sm:$0xff] %v1554
        %1558 = vst [vmem:[#allocation2 + $0x10] sm:$0x3] %v1555
        %v1559 = vld [vmem:[#allocation2] ss:$2 sm:$0xff]
        %s1560 = scalar_lea.vmem %s7, 768
        %v1561 = vld [vmem:[%s1560] sm:$0xff]
        %v1562 = vld [vmem:[%s1560 + $0x8] sm:$0xff]
        %v1563 = vld [vmem:[%s1560 + $0x10] sm:$0xff]
        %v1564 = vld [vmem:[%s1560 + $0x18] sm:$0xff]
        %v1565 = vld [vmem:[%s1560 + $0x20] sm:$0xff]
        %v1566 = vld [vmem:[%s1560 + $0x28] sm:$0xff]
        %v1567 = vld [vmem:[%s1560 + $0x30] sm:$0xff]
        %v1568 = vld [vmem:[%s1560 + $0x38] sm:$0xff]
        %v1569 = vld [vmem:[%s1560 + $0x40] sm:$0xff]
        %v1570 = vld [vmem:[%s1560 + $0x48] sm:$0xff]
        %v1571 = vld [vmem:[%s1560 + $0x50] sm:$0xff]
        %v1572 = vld [vmem:[%s1560 + $0x58] sm:$0xff]
        %v1573 = vld [vmem:[%s1560 + $0x60] sm:$0xff]
        %v1574 = vld [vmem:[%s1560 + $0x68] sm:$0xff]
        %v1575 = vld [vmem:[%s1560 + $0x70] sm:$0xff]
        %v1576 = vld [vmem:[%s1560 + $0x78] sm:$0xff]
        %1577 = vmatprep.subr.mxu0 0.0
        %1578 = vmatpush1.msra.mxu0 %v1561
        %1579 = vmatprep.subr.mxu0 0.0
        %1580 = vmatpush1.msra.mxu0 %v1562
        %1581 = vmatprep.subr.mxu0 0.0
        %1582 = vmatpush1.msra.mxu0 %v1563
        %1583 = vmatprep.subr.mxu0 0.0
        %1584 = vmatpush1.msra.mxu0 %v1564
        %1585 = vmatprep.subr.mxu0 0.0
        %1586 = vmatpush1.msra.mxu0 %v1565
        %1587 = vmatprep.subr.mxu0 0.0
        %1588 = vmatpush1.msra.mxu0 %v1566
        %1589 = vmatprep.subr.mxu0 0.0
        %1590 = vmatpush1.msra.mxu0 %v1567
        %1591 = vmatprep.subr.mxu0 0.0
        %1592 = vmatpush1.msra.mxu0 %v1568
        %1593 = vmatprep.subr.mxu0 0.0
        %1594 = vmatpush1.msra.mxu0 %v1569
        %1595 = vmatprep.subr.mxu0 0.0
        %1596 = vmatpush1.msra.mxu0 %v1570
        %1597 = vmatprep.subr.mxu0 0.0
        %1598 = vmatpush1.msra.mxu0 %v1571
        %1599 = vmatprep.subr.mxu0 0.0
        %1600 = vmatpush1.msra.mxu0 %v1572
        %1601 = vmatprep.subr.mxu0 0.0
        %1602 = vmatpush1.msra.mxu0 %v1573
        %1603 = vmatprep.subr.mxu0 0.0
        %1604 = vmatpush1.msra.mxu0 %v1574
        %1605 = vmatprep.subr.mxu0 0.0
        %1606 = vmatpush1.msra.mxu0 %v1575
        %1607 = vmatprep.subr.mxu0 0.0
        %1608 = vmatpush1.msra.mxu0 %v1576
        %1609 = vmatprep.subr.mxu0 0.0
        %1610 = vmatpush1.msra.mxu0 0.0
        %1611 = vmatprep.subr.mxu0 0.0
        %1612 = vmatpush1.msra.mxu0 0.0
        %1613 = vmatprep.subr.mxu0 0.0
        %1614 = vmatpush1.msra.mxu0 0.0
        %1615 = vmatprep.subr.mxu0 0.0
        %1616 = vmatpush1.msra.mxu0 0.0
        %1617 = vmatprep.subr.mxu0 0.0
        %1618 = vmatpush1.msra.mxu0 0.0
        %1619 = vmatprep.subr.mxu0 0.0
        %1620 = vmatpush1.msra.mxu0 0.0
        %1621 = vmatprep.subr.mxu0 0.0
        %1622 = vmatpush1.msra.mxu0 0.0
        %1623 = vmatprep.subr.mxu0 0.0
        %1624 = vmatpush1.msra.mxu0 0.0
        %1625 = vmatprep.subr.mxu0 0.0
        %1626 = vmatpush1.msra.mxu0 0.0
        %1627 = vmatprep.subr.mxu0 0.0
        %1628 = vmatpush1.msra.mxu0 0.0
        %1629 = vmatprep.subr.mxu0 0.0
        %1630 = vmatpush1.msra.mxu0 0.0
        %1631 = vmatprep.subr.mxu0 0.0
        %1632 = vmatpush1.msra.mxu0 0.0
        %1633 = vmatprep.subr.mxu0 0.0
        %1634 = vmatpush1.msra.mxu0 0.0
        %1635 = vmatprep.subr.mxu0 0.0
        %1636 = vmatpush1.msra.mxu0 0.0
        %1637 = vmatprep.subr.mxu0 0.0
        %1638 = vmatpush1.msra.mxu0 0.0
        %1639 = vmatprep.subr.mxu0 0.0
        %1640 = vmatpush1.msra.mxu0 0.0
        %1641 = vmatprep.mubr.f32.mxu0 0.0
        %1642 = vmatmul.mubr.f32.gmra.mrb[0].mxu0 %v1559
        %v1643 = vpop.f32.mrb[0].mxu0
        %v1644 = vadd.f32 0.0, %v1643
        %v1645 = vpop.f32.mrb[0].mxu0
        %1646 = vdwg.mxu0
        %v1647 = vadd.f32 %v1460, %v1644
        %v1648 = vld [vmem:[%s847] ss:$2 sm:$0xff]
        %s1649 = scalar_lea.vmem %s7, 896
        %v1650 = vld [vmem:[%s1649] sm:$0xff]
        %v1651 = vld [vmem:[%s1649 + $0x8] sm:$0xff]
        %v1652 = vld [vmem:[%s1649 + $0x10] sm:$0xff]
        %v1653 = vld [vmem:[%s1649 + $0x18] sm:$0xff]
        %v1654 = vld [vmem:[%s1649 + $0x20] sm:$0xff]
        %v1655 = vld [vmem:[%s1649 + $0x28] sm:$0xff]
        %v1656 = vld [vmem:[%s1649 + $0x30] sm:$0xff]
        %v1657 = vld [vmem:[%s1649 + $0x38] sm:$0xff]
        %v1658 = vld [vmem:[%s1649 + $0x40] sm:$0xff]
        %v1659 = vld [vmem:[%s1649 + $0x48] sm:$0xff]
        %v1660 = vld [vmem:[%s1649 + $0x50] sm:$0xff]
        %v1661 = vld [vmem:[%s1649 + $0x58] sm:$0xff]
        %v1662 = vld [vmem:[%s1649 + $0x60] sm:$0xff]
        %v1663 = vld [vmem:[%s1649 + $0x68] sm:$0xff]
        %v1664 = vld [vmem:[%s1649 + $0x70] sm:$0xff]
        %v1665 = vld [vmem:[%s1649 + $0x78] sm:$0xff]
        %1666 = vmatprep.subr.mxu0 0.0
        %1667 = vmatpush1.msra.mxu0 %v1650
        %1668 = vmatprep.subr.mxu0 0.0
        %1669 = vmatpush1.msra.mxu0 %v1651
        %1670 = vmatprep.subr.mxu0 0.0
        %1671 = vmatpush1.msra.mxu0 %v1652
        %1672 = vmatprep.subr.mxu0 0.0
        %1673 = vmatpush1.msra.mxu0 %v1653
        %1674 = vmatprep.subr.mxu0 0.0
        %1675 = vmatpush1.msra.mxu0 %v1654
        %1676 = vmatprep.subr.mxu0 0.0
        %1677 = vmatpush1.msra.mxu0 %v1655
        %1678 = vmatprep.subr.mxu0 0.0
        %1679 = vmatpush1.msra.mxu0 %v1656
        %1680 = vmatprep.subr.mxu0 0.0
        %1681 = vmatpush1.msra.mxu0 %v1657
        %1682 = vmatprep.subr.mxu0 0.0
        %1683 = vmatpush1.msra.mxu0 %v1658
        %1684 = vmatprep.subr.mxu0 0.0
        %1685 = vmatpush1.msra.mxu0 %v1659
        %1686 = vmatprep.subr.mxu0 0.0
        %1687 = vmatpush1.msra.mxu0 %v1660
        %1688 = vmatprep.subr.mxu0 0.0
        %1689 = vmatpush1.msra.mxu0 %v1661
        %1690 = vmatprep.subr.mxu0 0.0
        %1691 = vmatpush1.msra.mxu0 %v1662
        %1692 = vmatprep.subr.mxu0 0.0
        %1693 = vmatpush1.msra.mxu0 %v1663
        %1694 = vmatprep.subr.mxu0 0.0
        %1695 = vmatpush1.msra.mxu0 %v1664
        %1696 = vmatprep.subr.mxu0 0.0
        %1697 = vmatpush1.msra.mxu0 %v1665
        %1698 = vmatprep.subr.mxu0 0.0
        %1699 = vmatpush1.msra.mxu0 0.0
        %1700 = vmatprep.subr.mxu0 0.0
        %1701 = vmatpush1.msra.mxu0 0.0
        %1702 = vmatprep.subr.mxu0 0.0
        %1703 = vmatpush1.msra.mxu0 0.0
        %1704 = vmatprep.subr.mxu0 0.0
        %1705 = vmatpush1.msra.mxu0 0.0
        %1706 = vmatprep.subr.mxu0 0.0
        %1707 = vmatpush1.msra.mxu0 0.0
        %1708 = vmatprep.subr.mxu0 0.0
        %1709 = vmatpush1.msra.mxu0 0.0
        %1710 = vmatprep.subr.mxu0 0.0
        %1711 = vmatpush1.msra.mxu0 0.0
        %1712 = vmatprep.subr.mxu0 0.0
        %1713 = vmatpush1.msra.mxu0 0.0
        %1714 = vmatprep.subr.mxu0 0.0
        %1715 = vmatpush1.msra.mxu0 0.0
        %1716 = vmatprep.subr.mxu0 0.0
        %1717 = vmatpush1.msra.mxu0 0.0
        %1718 = vmatprep.subr.mxu0 0.0
        %1719 = vmatpush1.msra.mxu0 0.0
        %1720 = vmatprep.subr.mxu0 0.0
        %1721 = vmatpush1.msra.mxu0 0.0
        %1722 = vmatprep.subr.mxu0 0.0
        %1723 = vmatpush1.msra.mxu0 0.0
        %1724 = vmatprep.subr.mxu0 0.0
        %1725 = vmatpush1.msra.mxu0 0.0
        %1726 = vmatprep.subr.mxu0 0.0
        %1727 = vmatpush1.msra.mxu0 0.0
        %1728 = vmatprep.subr.mxu0 0.0
        %1729 = vmatpush1.msra.mxu0 0.0
        %1730 = vmatprep.mubr.f32.mxu0 0.0
        %1731 = vmatmul.mubr.f32.gmra.mrb[0].mxu0 %v1648
        %v1732 = vpop.f32.mrb[0].mxu0
        %v1733 = vadd.f32 0.0, %v1732
        %v1734 = vpop.f32.mrb[0].mxu0
        %1735 = vdwg.mxu0
        %v1736 = vadd.f32 %v1647, %v1733
        %v1737 = vld [vmem:[%s1006] ss:$2 sm:$0xff]
        %s1738 = scalar_lea.vmem %s7, 1024
        %v1739 = vld [vmem:[%s1738] sm:$0xff]
        %v1740 = vld [vmem:[%s1738 + $0x8] sm:$0xff]
        %v1741 = vld [vmem:[%s1738 + $0x10] sm:$0xff]
        %v1742 = vld [vmem:[%s1738 + $0x18] sm:$0xff]
        %v1743 = vld [vmem:[%s1738 + $0x20] sm:$0xff]
        %v1744 = vld [vmem:[%s1738 + $0x28] sm:$0xff]
        %v1745 = vld [vmem:[%s1738 + $0x30] sm:$0xff]
        %v1746 = vld [vmem:[%s1738 + $0x38] sm:$0xff]
        %v1747 = vld [vmem:[%s1738 + $0x40] sm:$0xff]
        %v1748 = vld [vmem:[%s1738 + $0x48] sm:$0xff]
        %v1749 = vld [vmem:[%s1738 + $0x50] sm:$0xff]
        %v1750 = vld [vmem:[%s1738 + $0x58] sm:$0xff]
        %v1751 = vld [vmem:[%s1738 + $0x60] sm:$0xff]
        %v1752 = vld [vmem:[%s1738 + $0x68] sm:$0xff]
        %v1753 = vld [vmem:[%s1738 + $0x70] sm:$0xff]
        %v1754 = vld [vmem:[%s1738 + $0x78] sm:$0xff]
        %1755 = vmatprep.subr.mxu0 0.0
        %1756 = vmatpush1.msra.mxu0 %v1739
        %1757 = vmatprep.subr.mxu0 0.0
        %1758 = vmatpush1.msra.mxu0 %v1740
        %1759 = vmatprep.subr.mxu0 0.0
        %1760 = vmatpush1.msra.mxu0 %v1741
        %1761 = vmatprep.subr.mxu0 0.0
        %1762 = vmatpush1.msra.mxu0 %v1742
        %1763 = vmatprep.subr.mxu0 0.0
        %1764 = vmatpush1.msra.mxu0 %v1743
        %1765 = vmatprep.subr.mxu0 0.0
        %1766 = vmatpush1.msra.mxu0 %v1744
        %1767 = vmatprep.subr.mxu0 0.0
        %1768 = vmatpush1.msra.mxu0 %v1745
        %1769 = vmatprep.subr.mxu0 0.0
        %1770 = vmatpush1.msra.mxu0 %v1746
        %1771 = vmatprep.subr.mxu0 0.0
        %1772 = vmatpush1.msra.mxu0 %v1747
        %1773 = vmatprep.subr.mxu0 0.0
        %1774 = vmatpush1.msra.mxu0 %v1748
        %1775 = vmatprep.subr.mxu0 0.0
        %1776 = vmatpush1.msra.mxu0 %v1749
        %1777 = vmatprep.subr.mxu0 0.0
        %1778 = vmatpush1.msra.mxu0 %v1750
        %1779 = vmatprep.subr.mxu0 0.0
        %1780 = vmatpush1.msra.mxu0 %v1751
        %1781 = vmatprep.subr.mxu0 0.0
        %1782 = vmatpush1.msra.mxu0 %v1752
        %1783 = vmatprep.subr.mxu0 0.0
        %1784 = vmatpush1.msra.mxu0 %v1753
        %1785 = vmatprep.subr.mxu0 0.0
        %1786 = vmatpush1.msra.mxu0 %v1754
        %1787 = vmatprep.subr.mxu0 0.0
        %1788 = vmatpush1.msra.mxu0 0.0
        %1789 = vmatprep.subr.mxu0 0.0
        %1790 = vmatpush1.msra.mxu0 0.0
        %1791 = vmatprep.subr.mxu0 0.0
        %1792 = vmatpush1.msra.mxu0 0.0
        %1793 = vmatprep.subr.mxu0 0.0
        %1794 = vmatpush1.msra.mxu0 0.0
        %1795 = vmatprep.subr.mxu0 0.0
        %1796 = vmatpush1.msra.mxu0 0.0
        %1797 = vmatprep.subr.mxu0 0.0
        %1798 = vmatpush1.msra.mxu0 0.0
        %1799 = vmatprep.subr.mxu0 0.0
        %1800 = vmatpush1.msra.mxu0 0.0
        %1801 = vmatprep.subr.mxu0 0.0
        %1802 = vmatpush1.msra.mxu0 0.0
        %1803 = vmatprep.subr.mxu0 0.0
        %1804 = vmatpush1.msra.mxu0 0.0
        %1805 = vmatprep.subr.mxu0 0.0
        %1806 = vmatpush1.msra.mxu0 0.0
        %1807 = vmatprep.subr.mxu0 0.0
        %1808 = vmatpush1.msra.mxu0 0.0
        %1809 = vmatprep.subr.mxu0 0.0
        %1810 = vmatpush1.msra.mxu0 0.0
        %1811 = vmatprep.subr.mxu0 0.0
        %1812 = vmatpush1.msra.mxu0 0.0
        %1813 = vmatprep.subr.mxu0 0.0
        %1814 = vmatpush1.msra.mxu0 0.0
        %1815 = vmatprep.subr.mxu0 0.0
        %1816 = vmatpush1.msra.mxu0 0.0
        %1817 = vmatprep.subr.mxu0 0.0
        %1818 = vmatpush1.msra.mxu0 0.0
        %1819 = vmatprep.mubr.f32.mxu0 0.0
        %1820 = vmatmul.mubr.f32.gmra.mrb[0].mxu0 %v1737
        %v1821 = vpop.f32.mrb[0].mxu0
        %v1822 = vadd.f32 0.0, %v1821
        %v1823 = vpop.f32.mrb[0].mxu0
        %1824 = vdwg.mxu0
        %v1825 = vadd.f32 %v1736, %v1822
        %v1826 = vld [vmem:[%s8] sm:$0x1]
        %v1828 = vlaneseq
        %v1829 = vshrl.u32 %v1828, 7
        %v1830 = vsub.s32 0, %v1829
        %v1831 = vrot.slane %v1826, %v1830
        %v1833 = vmul.f32 %v1825, %v1831
        %v1834 = vld [vmem:[%s9] sm:$0x1]
        %v1836 = vlaneseq
        %v1837 = vshrl.u32 %v1836, 7
        %v1838 = vsub.s32 0, %v1837
        %v1839 = vrot.slane %v1834, %v1838
        %v1841 = vadd.f32 %v1833, %v1839
        %v1842 = vmax.f32 %v1841, 0.0
        %v1843 = vld [vmem:[%s10] sm:$0xff]
        %v1844 = vld [vmem:[%s10 + $0x8] sm:$0xff]
        %v1845 = vld [vmem:[%s10 + $0x10] sm:$0xff]
        %v1846 = vld [vmem:[%s10 + $0x18] sm:$0xff]
        %v1847 = vld [vmem:[%s10 + $0x20] sm:$0xff]
        %v1848 = vld [vmem:[%s10 + $0x28] sm:$0xff]
        %v1849 = vld [vmem:[%s10 + $0x30] sm:$0xff]
        %v1850 = vld [vmem:[%s10 + $0x38] sm:$0xff]
        %v1851 = vld [vmem:[%s10 + $0x40] sm:$0xff]
        %v1852 = vld [vmem:[%s10 + $0x48] sm:$0xff]
        %v1853 = vld [vmem:[%s10 + $0x50] sm:$0xff]
        %v1854 = vld [vmem:[%s10 + $0x58] sm:$0xff]
        %v1855 = vld [vmem:[%s10 + $0x60] sm:$0xff]
        %v1856 = vld [vmem:[%s10 + $0x68] sm:$0xff]
        %v1857 = vld [vmem:[%s10 + $0x70] sm:$0xff]
        %v1858 = vld [vmem:[%s10 + $0x78] sm:$0xff]
        %1859 = vmatprep.subr.mxu0 0.0
        %1860 = vmatpush1.msra.mxu0 %v1843
        %1861 = vmatprep.subr.mxu0 0.0
        %1862 = vmatpush1.msra.mxu0 %v1844
        %1863 = vmatprep.subr.mxu0 0.0
        %1864 = vmatpush1.msra.mxu0 %v1845
        %1865 = vmatprep.subr.mxu0 0.0
        %1866 = vmatpush1.msra.mxu0 %v1846
        %1867 = vmatprep.subr.mxu0 0.0
        %1868 = vmatpush1.msra.mxu0 %v1847
        %1869 = vmatprep.subr.mxu0 0.0
        %1870 = vmatpush1.msra.mxu0 %v1848
        %1871 = vmatprep.subr.mxu0 0.0
        %1872 = vmatpush1.msra.mxu0 %v1849
        %1873 = vmatprep.subr.mxu0 0.0
        %1874 = vmatpush1.msra.mxu0 %v1850
        %1875 = vmatprep.subr.mxu0 0.0
        %1876 = vmatpush1.msra.mxu0 %v1851
        %1877 = vmatprep.subr.mxu0 0.0
        %1878 = vmatpush1.msra.mxu0 %v1852
        %1879 = vmatprep.subr.mxu0 0.0
        %1880 = vmatpush1.msra.mxu0 %v1853
        %1881 = vmatprep.subr.mxu0 0.0
        %1882 = vmatpush1.msra.mxu0 %v1854
        %1883 = vmatprep.subr.mxu0 0.0
        %1884 = vmatpush1.msra.mxu0 %v1855
        %1885 = vmatprep.subr.mxu0 0.0
        %1886 = vmatpush1.msra.mxu0 %v1856
        %1887 = vmatprep.subr.mxu0 0.0
        %1888 = vmatpush1.msra.mxu0 %v1857
        %1889 = vmatprep.subr.mxu0 0.0
        %1890 = vmatpush1.msra.mxu0 %v1858
        %1891 = vmatprep.subr.mxu0 0.0
        %1892 = vmatpush1.msra.mxu0 0.0
        %1893 = vmatprep.subr.mxu0 0.0
        %1894 = vmatpush1.msra.mxu0 0.0
        %1895 = vmatprep.subr.mxu0 0.0
        %1896 = vmatpush1.msra.mxu0 0.0
        %1897 = vmatprep.subr.mxu0 0.0
        %1898 = vmatpush1.msra.mxu0 0.0
        %1899 = vmatprep.subr.mxu0 0.0
        %1900 = vmatpush1.msra.mxu0 0.0
        %1901 = vmatprep.subr.mxu0 0.0
        %1902 = vmatpush1.msra.mxu0 0.0
        %1903 = vmatprep.subr.mxu0 0.0
        %1904 = vmatpush1.msra.mxu0 0.0
        %1905 = vmatprep.subr.mxu0 0.0
        %1906 = vmatpush1.msra.mxu0 0.0
        %1907 = vmatprep.subr.mxu0 0.0
        %1908 = vmatpush1.msra.mxu0 0.0
        %1909 = vmatprep.subr.mxu0 0.0
        %1910 = vmatpush1.msra.mxu0 0.0
        %1911 = vmatprep.subr.mxu0 0.0
        %1912 = vmatpush1.msra.mxu0 0.0
        %1913 = vmatprep.subr.mxu0 0.0
        %1914 = vmatpush1.msra.mxu0 0.0
        %1915 = vmatprep.subr.mxu0 0.0
        %1916 = vmatpush1.msra.mxu0 0.0
        %1917 = vmatprep.subr.mxu0 0.0
        %1918 = vmatpush1.msra.mxu0 0.0
        %1919 = vmatprep.subr.mxu0 0.0
        %1920 = vmatpush1.msra.mxu0 0.0
        %1921 = vmatprep.subr.mxu0 0.0
        %1922 = vmatpush1.msra.mxu0 0.0
        %1923 = vmatprep.mubr.f32.mxu0 0.0
        %1924 = vmatmul.mubr.f32.gmra.mrb[0].mxu0 %v1842
        %v1925 = vpop.f32.mrb[0].mxu0
        %v1926 = vadd.f32 0.0, %v1925
        %v1927 = vpop.f32.mrb[0].mxu0
        %1928 = vdwg.mxu0
        %v1929 = vld [vmem:[%s11] sm:$0x1]
        %v1931 = vlaneseq
        %v1932 = vshrl.u32 %v1931, 7
        %v1933 = vsub.s32 0, %v1932
        %v1934 = vrot.slane %v1929, %v1933
        %v1936 = vmul.f32 %v1926, %v1934
        %v1937 = vld [vmem:[%s12] sm:$0x1]
        %v1939 = vlaneseq
        %v1940 = vshrl.u32 %v1939, 7
        %v1941 = vsub.s32 0, %v1940
        %v1942 = vrot.slane %v1937, %v1941
        %v1944 = vadd.f32 %v1936, %v1942
        %v1945 = vld [vmem:[%s681] sm:$0xff]
        %v1946 = vld [vmem:[%s13] sm:$0xff]
        %v1947 = vld [vmem:[%s13 + $0x8] sm:$0xff]
        %v1948 = vld [vmem:[%s13 + $0x10] sm:$0xff]
        %v1949 = vld [vmem:[%s13 + $0x18] sm:$0xff]
        %v1950 = vld [vmem:[%s13 + $0x20] sm:$0xff]
        %v1951 = vld [vmem:[%s13 + $0x28] sm:$0xff]
        %v1952 = vld [vmem:[%s13 + $0x30] sm:$0xff]
        %v1953 = vld [vmem:[%s13 + $0x38] sm:$0xff]
        %v1954 = vld [vmem:[%s13 + $0x40] sm:$0xff]
        %v1955 = vld [vmem:[%s13 + $0x48] sm:$0xff]
        %v1956 = vld [vmem:[%s13 + $0x50] sm:$0xff]
        %v1957 = vld [vmem:[%s13 + $0x58] sm:$0xff]
        %v1958 = vld [vmem:[%s13 + $0x60] sm:$0xff]
        %v1959 = vld [vmem:[%s13 + $0x68] sm:$0xff]
        %v1960 = vld [vmem:[%s13 + $0x70] sm:$0xff]
        %v1961 = vld [vmem:[%s13 + $0x78] sm:$0xff]
        %1962 = vmatprep.subr.mxu0 0.0
        %1963 = vmatpush1.msra.mxu0 %v1946
        %1964 = vmatprep.subr.mxu0 0.0
        %1965 = vmatpush1.msra.mxu0 %v1947
        %1966 = vmatprep.subr.mxu0 0.0
        %1967 = vmatpush1.msra.mxu0 %v1948
        %1968 = vmatprep.subr.mxu0 0.0
        %1969 = vmatpush1.msra.mxu0 %v1949
        %1970 = vmatprep.subr.mxu0 0.0
        %1971 = vmatpush1.msra.mxu0 %v1950
        %1972 = vmatprep.subr.mxu0 0.0
        %1973 = vmatpush1.msra.mxu0 %v1951
        %1974 = vmatprep.subr.mxu0 0.0
        %1975 = vmatpush1.msra.mxu0 %v1952
        %1976 = vmatprep.subr.mxu0 0.0
        %1977 = vmatpush1.msra.mxu0 %v1953
        %1978 = vmatprep.subr.mxu0 0.0
        %1979 = vmatpush1.msra.mxu0 %v1954
        %1980 = vmatprep.subr.mxu0 0.0
        %1981 = vmatpush1.msra.mxu0 %v1955
        %1982 = vmatprep.subr.mxu0 0.0
        %1983 = vmatpush1.msra.mxu0 %v1956
        %1984 = vmatprep.subr.mxu0 0.0
        %1985 = vmatpush1.msra.mxu0 %v1957
        %1986 = vmatprep.subr.mxu0 0.0
        %1987 = vmatpush1.msra.mxu0 %v1958
        %1988 = vmatprep.subr.mxu0 0.0
        %1989 = vmatpush1.msra.mxu0 %v1959
        %1990 = vmatprep.subr.mxu0 0.0
        %1991 = vmatpush1.msra.mxu0 %v1960
        %1992 = vmatprep.subr.mxu0 0.0
        %1993 = vmatpush1.msra.mxu0 %v1961
        %1994 = vmatprep.subr.mxu0 0.0
        %1995 = vmatpush1.msra.mxu0 0.0
        %1996 = vmatprep.subr.mxu0 0.0
        %1997 = vmatpush1.msra.mxu0 0.0
        %1998 = vmatprep.subr.mxu0 0.0
        %1999 = vmatpush1.msra.mxu0 0.0
        %2000 = vmatprep.subr.mxu0 0.0
        %2001 = vmatpush1.msra.mxu0 0.0
        %2002 = vmatprep.subr.mxu0 0.0
        %2003 = vmatpush1.msra.mxu0 0.0
        %2004 = vmatprep.subr.mxu0 0.0
        %2005 = vmatpush1.msra.mxu0 0.0
        %2006 = vmatprep.subr.mxu0 0.0
        %2007 = vmatpush1.msra.mxu0 0.0
        %2008 = vmatprep.subr.mxu0 0.0
        %2009 = vmatpush1.msra.mxu0 0.0
        %2010 = vmatprep.subr.mxu0 0.0
        %2011 = vmatpush1.msra.mxu0 0.0
        %2012 = vmatprep.subr.mxu0 0.0
        %2013 = vmatpush1.msra.mxu0 0.0
        %2014 = vmatprep.subr.mxu0 0.0
        %2015 = vmatpush1.msra.mxu0 0.0
        %2016 = vmatprep.subr.mxu0 0.0
        %2017 = vmatpush1.msra.mxu0 0.0
        %2018 = vmatprep.subr.mxu0 0.0
        %2019 = vmatpush1.msra.mxu0 0.0
        %2020 = vmatprep.subr.mxu0 0.0
        %2021 = vmatpush1.msra.mxu0 0.0
        %2022 = vmatprep.subr.mxu0 0.0
        %2023 = vmatpush1.msra.mxu0 0.0
        %2024 = vmatprep.subr.mxu0 0.0
        %2025 = vmatpush1.msra.mxu0 0.0
        %2026 = vmatprep.mubr.f32.mxu0 0.0
        %2027 = vmatmul.mubr.f32.gmra.mrb[0].mxu0 %v1945
        %v2028 = vpop.f32.mrb[0].mxu0
        %v2029 = vadd.f32 0.0, %v2028
        %v2030 = vpop.f32.mrb[0].mxu0
        %2031 = vdwg.mxu0
        %v2032 = vld [vmem:[%s14] sm:$0x1]
        %v2034 = vlaneseq
        %v2035 = vshrl.u32 %v2034, 7
        %v2036 = vsub.s32 0, %v2035
        %v2037 = vrot.slane %v2032, %v2036
        %v2039 = vmul.f32 %v2029, %v2037
        %v2040 = vld [vmem:[%s15] sm:$0x1]
        %v2042 = vlaneseq
        %v2043 = vshrl.u32 %v2042, 7
        %v2044 = vsub.s32 0, %v2043
        %v2045 = vrot.slane %v2040, %v2044
        %v2047 = vadd.f32 %v2039, %v2045
        %v2048 = vadd.f32 %v1944, %v2047
        %v2049 = vmax.f32 %v2048, 0.0
        %2050 = vst [vmem:[%s636] sm:$0xff] %v2049
        %s2051 = sand.u32 %s426, 1
        %s2052 = scalar_lea.sflag [#allocation4], %s2051
        %s2053 = sand.u32 %s426, 1
        %s2054 = smul.addr %s2053, 8
        %s2055 = scalar_lea.vmem [#allocation3], %s2054
        // Predicated region
        $region85: #{tpu_custom_call.1} parent=83 // pred_check
          %p2056 = pneg %p436
        $region86: #{tpu_custom_call.1} parent=83 // pred_check_branch
          %2058 = sbr.rel (%p2056) target = $region88
        $region87: #{tpu_custom_call.1} parent=83 // pred_region
          %s2060 = ssub.s32 128, 128
          %2061 = vsyncadd %s2052, %s2060
          %s2062 = smul.addr %s34, 8
          %s2063 = sadd.s32 %s35, %s2062
          %s2064 = smul.addr %s2063, 128
          %s2065 = scalar_lea.hbm %s16, %s2064
          %s2067 = sshll.u32 %s2055, 4
          %s2068 = int_to_ptr.vmem [resolvable:$true] %s2067
          %2070 = dma.vmem_to_hbm [thread:$0]  %s2068, 128, %s2065, %s2052
        $region88: #{tpu_custom_call.1} parent=83 // pred_fallthru
          _
      $region84: #{tpu_custom_call.1} parent=5 // pred_fallthru
        _
      %p2071 = scmp.le.s32.totalorder 2, %s25
      // Predicated region
      $region89: #{tpu_custom_call.1} parent=5 // pred_check
        %p2072 = pneg %p2071
      $region90: #{tpu_custom_call.1} parent=5 // pred_check_branch
        %2074 = sbr.rel (%p2072) target = $region92
      $region91: #{tpu_custom_call.1} parent=5 // pred_region
        %s2075 = ssub.s32 %s25, 2
        // Predicated region
        $region93: #{tpu_custom_call.1} parent=91 // pred_check
          %p2076 = pneg %p442
        $region94: #{tpu_custom_call.1} parent=91 // pred_check_branch
          %2078 = sbr.rel (%p2076) target = $region96
        $region95: #{tpu_custom_call.1} parent=91 // pred_region
          %s2079 = sand.u32 %s427, 1
          %s2080 = scalar_lea.sflag [#allocation4], %s2079
          %s2081 = sand.u32 %s427, 1
          %s2082 = smul.addr %s2081, 8
          %s2083 = scalar_lea.vmem [#allocation3], %s2082
          %2084 = dma.done %s2080, 128
        $region96: #{tpu_custom_call.1} parent=91 // pred_fallthru
          _
      $region92: #{tpu_custom_call.1} parent=5 // pred_fallthru
        _
    $region6: #{tpu_custom_call.1} parent=1 // loop_footer
      %s29 = sadd.s32 1, %s25
    $region7: #{tpu_custom_call.1} parent=1 // loop_footer_branch
      %24 = sbr.rel target = $region3
    $region8: #{tpu_custom_call.1} parent=1 // loop_exit
      _
    %2085 = vsyncpa [#allocation4], 1
    %s2086 = scalar_lea.sflag [#allocation4], 1
    %2087 = vsyncpa %s2086, 1

</llo_original>
